<compile_context>
chip_gen: v7x
topology: tpu7x:2x2x1
jax: 0.10.0
libtpu: 0.0.40
codegen_flags: <defaults>
</compile_context>

<pallas_src>
import jax
import jax.numpy as jnp
from jax.experimental import pallas as pl
from jax.experimental.pallas import tpu as pltpu

LANE = 128
EPS = 1e-5
_VMEM_LIMIT = 48 * 1024 * 1024  # safe on v5e/v6e (128 MiB) and v7x (64 MiB) physical VMEM


def _round_up(x, m):
    return (x + m - 1) // m * m


# ---------------------------------------------------------------------------
# Pallas kernels
# ---------------------------------------------------------------------------
def _conv_stats_kernel(x_ref, w_ref, out_ref, sum_ref, sq_ref):
    """Pass 1 (per M-tile): conv as bf16 MXU matmul (f32 acc) + per-channel partial sums.

    x_ref:   [TM, Kp]  bf16 im2col tile       w_ref:  [Kp, Cp] bf16 flattened weights
    out_ref: [TM, Cp]  f32 conv output tile
    sum_ref/sq_ref: [1, 1, Cp] f32 per-tile sum / sum-of-squares (for BN batch stats)
    """
    acc = jnp.dot(x_ref[...], w_ref[...], preferred_element_type=jnp.float32)
    out_ref[...] = acc
    sum_ref[...] = jnp.sum(acc, axis=0, keepdims=True)[None]
    sq_ref[...] = jnp.sum(acc * acc, axis=0, keepdims=True)[None]


def _bn_relu_kernel(x_ref, scale_ref, shift_ref, o_ref):
    """Pass 2 (per M-tile): folded BatchNorm + ReLU, y = max(x*s + t, 0), emit bf16."""
    y = x_ref[...] * scale_ref[...] + shift_ref[...]
    o_ref[...] = jnp.maximum(y, 0.0).astype(o_ref.dtype)


def _pool_linear_kernel(pm_ref, x_ref, w_ref, b_ref, o_ref, acc_ref):
    """AdaptiveAvgPool2d(1) expressed as an MXU matmul, fused with the final Linear.

    pm_ref: [Bp, TM] bf16 0/1 pooling-indicator tile   x_ref: [TM, Cp] bf16 activations
    w_ref:  [Cp, Dp] f32 (Linear weight pre-scaled by 1/HW)   b_ref: [1, Dp] f32 bias
    o_ref:  [Bp, Dp] f32 logits (resident accumulator across the M grid)
    acc_ref:[Bp, Cp] f32 scratch (pooled sums)
    """
    i = pl.program_id(0)

    @pl.when(i == 0)
    def _():
        acc_ref[...] = jnp.zeros_like(acc_ref)

    acc_ref[...] += jnp.dot(pm_ref[...], x_ref[...],
                            preferred_element_type=jnp.float32)

    @pl.when(i == pl.num_programs(0) - 1)
    def _():
        o_ref[...] = (
            jnp.dot(acc_ref[...], w_ref[...], preferred_element_type=jnp.float32)
            + b_ref[...]
        )


# ---------------------------------------------------------------------------
# Per-layer wrapper: Conv2d(bias=False) -> BatchNorm2d(train stats) -> ReLU
# ---------------------------------------------------------------------------
def conv_bn_relu(x_nhwc, w_oihw, gamma, beta, stride, padding, *, tile_m=512):
    B, H, W, Cin = x_nhwc.shape
    Cout, _, KH, KW = w_oihw.shape
    Ho = (H + 2 * padding - KH) // stride + 1
    Wo = (W + 2 * padding - KW) // stride + 1
    M = B * Ho * Wo
    K = KH * KW * Cin
    Cp = _round_up(Cout, LANE)
    Kp = _round_up(K, LANE)

    # --- glue: im2col patch matrix in bf16 ((kh, kw, cin) order). ---
    # TODO(synk): build patches per M-tile inside the kernel (tap accumulation over
    #             KH*KW shifted reads) to remove the KH*KW x HBM blowup of im2col.
    xp = jnp.pad(x_nhwc.astype(jnp.bfloat16),
                 ((0, 0), (padding, padding), (padding, padding), (0, 0)))
    patches = []
    for kh in range(KH):
        for kw in range(KW):
            patches.append(
                xp[:, kh:kh + stride * Ho:stride, kw:kw + stride * Wo:stride, :])
    xcol = jnp.concatenate(patches, axis=-1).reshape(M, K)

    # M tile (multiple of 16 for bf16 sublane packing) and zero padding of M / K.
    tm = tile_m if M > tile_m else _round_up(M, 16)
    Mp = _round_up(M, tm)
    n_tiles = Mp // tm
    xcol = jnp.pad(xcol, ((0, Mp - M), (0, Kp - K)))

    # [Cout, Cin, KH, KW] -> [KH*KW*Cin, Cout] in (kh, kw, cin) order, pad, bf16.
    wmat = jnp.transpose(w_oihw, (2, 3, 1, 0)).reshape(K, Cout)
    wmat = jnp.pad(wmat, ((0, Kp - K), (0, Cp - Cout))).astype(jnp.bfloat16)

    # Pass 1: conv matmul + per-tile channel sums (parallel over M tiles).
    conv_out, sums, sqs = pl.pallas_call(
        _conv_stats_kernel,
        grid=(n_tiles,),
        in_specs=[
            pl.BlockSpec((tm, Kp), lambda i: (i, 0)),
            pl.BlockSpec((Kp, Cp), lambda i: (0, 0)),
        ],
        out_specs=[
            pl.BlockSpec((tm, Cp), lambda i: (i, 0)),
            pl.BlockSpec((1, 1, Cp), lambda i: (i, 0, 0)),
            pl.BlockSpec((1, 1, Cp), lambda i: (i, 0, 0)),
        ],
        out_shape=[
            jax.ShapeDtypeStruct((Mp, Cp), jnp.float32),
            jax.ShapeDtypeStruct((n_tiles, 1, Cp), jnp.float32),
            jax.ShapeDtypeStruct((n_tiles, 1, Cp), jnp.float32),
        ],
        compiler_params=pltpu.CompilerParams(
            dimension_semantics=("parallel",),
            vmem_limit_bytes=_VMEM_LIMIT),
    )(xcol, wmat)

    # --- glue (O(Cp)): fold BatchNorm (training-mode batch stats, biased var) into a
    #     single per-channel scale/shift.  Zero-padded M rows / channels contribute
    #     exact zeros, so the sums stay correct; divide by the real M only.
    mean = jnp.sum(sums, axis=(0, 1)) / M
    var = jnp.maximum(jnp.sum(sqs, axis=(0, 1)) / M - mean * mean, 0.0)
    gamma_p = jnp.pad(gamma.astype(jnp.float32), (0, Cp - Cout), constant_values=1.0)
    beta_p = jnp.pad(beta.astype(jnp.float32), (0, Cp - Cout))
    scale = gamma_p * jax.lax.rsqrt(var + EPS)
    shift = beta_p - mean * scale

    # Pass 2: normalize + ReLU per M tile, emitted as bf16 for the next matmul.
    y = pl.pallas_call(
        _bn_relu_kernel,
        grid=(n_tiles,),
        in_specs=[
            pl.BlockSpec((tm, Cp), lambda i: (i, 0)),
            pl.BlockSpec((1, Cp), lambda i: (0, 0)),
            pl.BlockSpec((1, Cp), lambda i: (0, 0)),
        ],
        out_specs=pl.BlockSpec((tm, Cp), lambda i: (i, 0)),
        out_shape=jax.ShapeDtypeStruct((Mp, Cp), jnp.bfloat16),
        compiler_params=pltpu.CompilerParams(
            dimension_semantics=("parallel",),
            vmem_limit_bytes=_VMEM_LIMIT),
    )(conv_out, scale.reshape(1, Cp), shift.reshape(1, Cp))

    # Strip M / channel padding; the next layer re-pads its own matmul operands.
    return y[:M, :Cout].reshape(B, Ho, Wo, Cout)


# ---------------------------------------------------------------------------
# AdaptiveAvgPool2d(1) + Linear head (pooling as an MXU matmul, fused linear)
# ---------------------------------------------------------------------------
def avgpool_linear(x_nhwc, lin_w, lin_b, *, tile_m=512):
    B, Ho, Wo, C = x_nhwc.shape
    HW = Ho * Wo
    M = B * HW
    num_classes = lin_w.shape[1]
    Cp = _round_up(C, LANE)
    Dp = _round_up(num_classes, LANE)
    Bp = _round_up(B, 8)

    tm = tile_m if M > tile_m else _round_up(M, 16)
    Mp = _round_up(M, tm)
    n_tiles = Mp // tm

    x = jnp.pad(x_nhwc.reshape(M, C).astype(jnp.bfloat16),
                ((0, Mp - M), (0, Cp - C)))

    # 0/1 pooling indicator [Bp, Mp] (bf16-exact); the 1/HW scale is folded into W.
    row_batch = jnp.arange(Mp) // HW
    pm = (jnp.arange(Bp)[:, None] == row_batch[None, :]) & (jnp.arange(Mp)[None, :] < M)
    pm = pm.astype(jnp.bfloat16)

    w = jnp.pad(lin_w.astype(jnp.float32) / HW,
                ((0, Cp - C), (0, Dp - num_classes)))
    b = jnp.pad(lin_b.reshape(1, num_classes).astype(jnp.float32),
                ((0, 0), (0, Dp - num_classes)))

    out = pl.pallas_call(
        _pool_linear_kernel,
        grid=(n_tiles,),
        in_specs=[
            pl.BlockSpec((Bp, tm), lambda i: (0, i)),
            pl.BlockSpec((tm, Cp), lambda i: (i, 0)),
            pl.BlockSpec((Cp, Dp), lambda i: (0, 0)),
            pl.BlockSpec((1, Dp), lambda i: (0, 0)),
        ],
        out_specs=pl.BlockSpec((Bp, Dp), lambda i: (0, 0)),
        out_shape=jax.ShapeDtypeStruct((Bp, Dp), jnp.float32),
        scratch_shapes=[pltpu.VMEM((Bp, Cp), jnp.float32)],
        compiler_params=pltpu.CompilerParams(
            dimension_semantics=("arbitrary",),   # resident accumulator across M tiles
            vmem_limit_bytes=_VMEM_LIMIT),
    )(pm, x, w, b)
    return out[:B, :num_classes]


# ---------------------------------------------------------------------------
# Full FCNN forward
# ---------------------------------------------------------------------------
def fcnn_forward(x_nchw, params, channel_params):
    # PyTorch NCHW input -> NHWC for the conv stack.
    x = jnp.transpose(x_nchw, (0, 2, 3, 1)).astype(jnp.float32)
    for (ks, _cout, stride), layer in zip(channel_params, params["layers"]):
        padding = 1 + ks // 2   # exactly the PyTorch module's padding rule
        x = conv_bn_relu(x, layer["w"], layer["gamma"], layer["beta"], stride, padding)
    # TODO(synk): torch's .squeeze() also drops the batch dim when B == 1; here the
    #             output is always [B, num_classes].  BatchNorm eval-mode (running
    #             stats) path is not implemented (training-mode batch stats only).
    return avgpool_linear(x, params["lin_w"], params["lin_b"])


# ---------------------------------------------------------------------------
# Deterministic parameter init (mirrors shapes from FCNN.__init__)
# ---------------------------------------------------------------------------
def init_params(key, in_channels, channel_params, num_classes):
    params = {"layers": []}
    cin = in_channels
    for ks, cout, _stride in channel_params:
        key, kw_ = jax.random.split(key)
        fan_in = cin * ks * ks
        w = jax.random.normal(kw_, (cout, cin, ks, ks), jnp.float32) * (1.0 / fan_in) ** 0.5
        gamma = jnp.ones((cout,), jnp.float32)   # BatchNorm2d default weight
        beta = jnp.zeros((cout,), jnp.float32)   # BatchNorm2d default bias
        params["layers"].append({"w": w, "gamma": gamma, "beta": beta})
        cin = cout
    key, k_w, k_b = jax.random.split(key, 3)
    lim = (1.0 / cin) ** 0.5
    params["lin_w"] = jax.random.uniform(k_w, (cin, num_classes), jnp.float32, -lim, lim)
    params["lin_b"] = jax.random.uniform(k_b, (num_classes,), jnp.float32, -lim, lim)
    return params


if __name__ == "__main__":
    # Small config: in_channels=4, two conv layers, 10 classes.
    channel_params = [(3, 8, 2), (5, 16, 2)]  # (kernel_size, out_channels, stride)
    in_channels, num_classes = 4, 10

    key = jax.random.PRNGKey(0)
    key, k_x, k_p = jax.random.split(key, 3)
    x = jax.random.normal(k_x, (2, in_channels, 16, 16), jnp.float32)  # [B, C, H, W]
    params = init_params(k_p, in_channels, channel_params, num_classes)

    fwd = jax.jit(lambda xx, pp: fcnn_forward(xx, pp, channel_params))
    out = jax.block_until_ready(fwd(x, params))
    assert out.shape == (2, num_classes), out.shape
    assert bool(jnp.all(jnp.isfinite(out)))
    print("KERNEL_OK")
</pallas_src>

<mosaic_0001>
module attributes {stable_mosaic.version = 11 : i64} {
  func.func @_conv_stats_kernel(%arg0: i32, %arg1: memref<176x128xbf16, #tpu.memory_space<vmem>>, %arg2: memref<128x128xbf16, #tpu.memory_space<vmem>>, %arg3: memref<176x128xf32, #tpu.memory_space<vmem>>, %arg4: memref<1x1x128xf32, #tpu.memory_space<vmem>>, %arg5: memref<1x1x128xf32, #tpu.memory_space<vmem>>) attributes {dimension_semantics = [#tpu.dimension_semantics<parallel>], iteration_bounds = array<i64: 1>, scalar_prefetch = 0 : i64, scratch_operands = 0 : i64, tpu.core_type = #tpu.core_type<tc>, window_params = [{transform_indices = @transform_0, window_bounds = array<i64: 176, 128>}, {pipeline_mode = #tpu.pipeline_mode<synchronous>, transform_indices = @transform_1, window_bounds = array<i64: 128, 128>}, {transform_indices = @transform_2, window_bounds = array<i64: 176, 128>}, {transform_indices = @transform_3, window_bounds = array<i64: 1, 1, 128>}, {transform_indices = @transform_4, window_bounds = array<i64: 1, 1, 128>}]} {
    %c0 = arith.constant 0 : index
    %c0_0 = arith.constant 0 : index
    %0 = vector.load %arg1[%c0, %c0_0] : memref<176x128xbf16, #tpu.memory_space<vmem>>, vector<176x128xbf16>
    %c0_1 = arith.constant 0 : index
    %c0_2 = arith.constant 0 : index
    %1 = vector.load %arg2[%c0_1, %c0_2] : memref<128x128xbf16, #tpu.memory_space<vmem>>, vector<128x128xbf16>
    %cst = arith.constant dense<0.000000e+00> : vector<176x128xf32>
    %2 = tpu.matmul %0, %1, %cst {dimension_numbers = #tpu.dot_dimension_numbers<[1], [0], [0], [1], [0, 0, 1, 1], [], []>} : vector<176x128xbf16>, vector<128x128xbf16>, vector<176x128xf32> -> vector<176x128xf32>
    %c0_3 = arith.constant 0 : index
    %c0_4 = arith.constant 0 : index
    %3 = vector.load %arg3[%c0_3, %c0_4] : memref<176x128xf32, #tpu.memory_space<vmem>>, vector<176x128xf32>
    tpu.vector_store %arg3[%c0_3, %c0_4], %2 {strides = array<i32>} : memref<176x128xf32, #tpu.memory_space<vmem>>, vector<176x128xf32>,
    %cst_5 = arith.constant dense<0.000000e+00> : vector<128xf32>
    %4 = vector.multi_reduction <add>, %2, %cst_5 [0] : vector<176x128xf32> to vector<128xf32>
    %5 = vector.shape_cast %4 : vector<128xf32> to vector<1x128xf32>
    %6 = vector.shape_cast %5 : vector<1x128xf32> to vector<1x1x128xf32>
    %c0_6 = arith.constant 0 : index
    %c0_7 = arith.constant 0 : index
    %c0_8 = arith.constant 0 : index
    %7 = vector.load %arg4[%c0_6, %c0_7, %c0_8] : memref<1x1x128xf32, #tpu.memory_space<vmem>>, vector<1x1x128xf32>
    tpu.vector_store %arg4[%c0_6, %c0_7, %c0_8], %6 {strides = array<i32>} : memref<1x1x128xf32, #tpu.memory_space<vmem>>, vector<1x1x128xf32>,
    %8 = arith.mulf %2, %2 : vector<176x128xf32>
    %cst_9 = arith.constant dense<0.000000e+00> : vector<128xf32>
    %9 = vector.multi_reduction <add>, %8, %cst_9 [0] : vector<176x128xf32> to vector<128xf32>
    %10 = vector.shape_cast %9 : vector<128xf32> to vector<1x128xf32>
    %11 = vector.shape_cast %10 : vector<1x128xf32> to vector<1x1x128xf32>
    %c0_10 = arith.constant 0 : index
    %c0_11 = arith.constant 0 : index
    %c0_12 = arith.constant 0 : index
    %12 = vector.load %arg5[%c0_10, %c0_11, %c0_12] : memref<1x1x128xf32, #tpu.memory_space<vmem>>, vector<1x1x128xf32>
    tpu.vector_store %arg5[%c0_10, %c0_11, %c0_12], %11 {strides = array<i32>} : memref<1x1x128xf32, #tpu.memory_space<vmem>>, vector<1x1x128xf32>,
    return
  }
  func.func @transform_0(%arg0: i32) -> (i32, i32) {
    %c0_i32 = arith.constant 0 : i32
    %c0_i32_0 = arith.constant 0 : i32
    return %arg0, %c0_i32 : i32, i32
  }
  func.func @transform_1(%arg0: i32) -> (i32, i32) {
    %c0_i32 = arith.constant 0 : i32
    %c0_i32_0 = arith.constant 0 : i32
    %c0_i32_1 = arith.constant 0 : i32
    return %c0_i32, %c0_i32_0 : i32, i32
  }
  func.func @transform_2(%arg0: i32) -> (i32, i32) {
    %c0_i32 = arith.constant 0 : i32
    %c0_i32_0 = arith.constant 0 : i32
    return %arg0, %c0_i32 : i32, i32
  }
  func.func @transform_3(%arg0: i32) -> (i32, i32, i32) {
    %c0_i32 = arith.constant 0 : i32
    %c0_i32_0 = arith.constant 0 : i32
    %c0_i32_1 = arith.constant 0 : i32
    return %arg0, %c0_i32, %c0_i32_0 : i32, i32, i32
  }
  func.func @transform_4(%arg0: i32) -> (i32, i32, i32) {
    %c0_i32 = arith.constant 0 : i32
    %c0_i32_0 = arith.constant 0 : i32
    %c0_i32_1 = arith.constant 0 : i32
    return %arg0, %c0_i32, %c0_i32_0 : i32, i32, i32
  }
}

module attributes {stable_mosaic.version = 11 : i64} {
  func.func @_bn_relu_kernel(%arg0: i32, %arg1: memref<176x128xf32, #tpu.memory_space<vmem>>, %arg2: memref<1x128xf32, #tpu.memory_space<vmem>>, %arg3: memref<1x128xf32, #tpu.memory_space<vmem>>, %arg4: memref<176x128xbf16, #tpu.memory_space<vmem>>) attributes {dimension_semantics = [#tpu.dimension_semantics<parallel>], iteration_bounds = array<i64: 1>, scalar_prefetch = 0 : i64, scratch_operands = 0 : i64, tpu.core_type = #tpu.core_type<tc>, window_params = [{transform_indices = @transform_0, window_bounds = array<i64: 176, 128>}, {pipeline_mode = #tpu.pipeline_mode<synchronous>, transform_indices = @transform_1, window_bounds = array<i64: 1, 128>}, {pipeline_mode = #tpu.pipeline_mode<synchronous>, transform_indices = @transform_2, window_bounds = array<i64: 1, 128>}, {transform_indices = @transform_3, window_bounds = array<i64: 176, 128>}]} {
    %c0 = arith.constant 0 : index
    %c0_0 = arith.constant 0 : index
    %0 = vector.load %arg1[%c0, %c0_0] : memref<176x128xf32, #tpu.memory_space<vmem>>, vector<176x128xf32>
    %c0_1 = arith.constant 0 : index
    %c0_2 = arith.constant 0 : index
    %1 = vector.load %arg2[%c0_1, %c0_2] : memref<1x128xf32, #tpu.memory_space<vmem>>, vector<1x128xf32>
    %2 = vector.broadcast %1 : vector<1x128xf32> to vector<176x128xf32>
    %3 = arith.mulf %0, %2 : vector<176x128xf32>
    %c0_3 = arith.constant 0 : index
    %c0_4 = arith.constant 0 : index
    %4 = vector.load %arg3[%c0_3, %c0_4] : memref<1x128xf32, #tpu.memory_space<vmem>>, vector<1x128xf32>
    %5 = vector.broadcast %4 : vector<1x128xf32> to vector<176x128xf32>
    %6 = arith.addf %3, %5 : vector<176x128xf32>
    %cst = arith.constant 0.000000e+00 : f32
    %7 = vector.broadcast %cst : f32 to vector<176x128xf32>
    %8 = arith.maximumf %6, %7 : vector<176x128xf32>
    %9 = arith.truncf %8 : vector<176x128xf32> to vector<176x128xbf16>
    %c0_5 = arith.constant 0 : index
    %c0_6 = arith.constant 0 : index
    %10 = vector.load %arg4[%c0_5, %c0_6] : memref<176x128xbf16, #tpu.memory_space<vmem>>, vector<176x128xbf16>
    tpu.vector_store %arg4[%c0_5, %c0_6], %9 {strides = array<i32>} : memref<176x128xbf16, #tpu.memory_space<vmem>>, vector<176x128xbf16>,
    return
  }
  func.func @transform_0(%arg0: i32) -> (i32, i32) {
    %c0_i32 = arith.constant 0 : i32
    %c0_i32_0 = arith.constant 0 : i32
    return %arg0, %c0_i32 : i32, i32
  }
  func.func @transform_1(%arg0: i32) -> (i32, i32) {
    %c0_i32 = arith.constant 0 : i32
    %c0_i32_0 = arith.constant 0 : i32
    %c0_i32_1 = arith.constant 0 : i32
    return %c0_i32, %c0_i32_0 : i32, i32
  }
  func.func @transform_2(%arg0: i32) -> (i32, i32) {
    %c0_i32 = arith.constant 0 : i32
    %c0_i32_0 = arith.constant 0 : i32
    %c0_i32_1 = arith.constant 0 : i32
    return %c0_i32, %c0_i32_0 : i32, i32
  }
  func.func @transform_3(%arg0: i32) -> (i32, i32) {
    %c0_i32 = arith.constant 0 : i32
    %c0_i32_0 = arith.constant 0 : i32
    return %arg0, %c0_i32 : i32, i32
  }
}

module attributes {stable_mosaic.version = 11 : i64} {
  func.func @_bn_relu_kernel(%arg0: i32, %arg1: memref<80x128xf32, #tpu.memory_space<vmem>>, %arg2: memref<1x128xf32, #tpu.memory_space<vmem>>, %arg3: memref<1x128xf32, #tpu.memory_space<vmem>>, %arg4: memref<80x128xbf16, #tpu.memory_space<vmem>>) attributes {dimension_semantics = [#tpu.dimension_semantics<parallel>], iteration_bounds = array<i64: 1>, scalar_prefetch = 0 : i64, scratch_operands = 0 : i64, tpu.core_type = #tpu.core_type<tc>, window_params = [{transform_indices = @transform_0, window_bounds = array<i64: 80, 128>}, {pipeline_mode = #tpu.pipeline_mode<synchronous>, transform_indices = @transform_1, window_bounds = array<i64: 1, 128>}, {pipeline_mode = #tpu.pipeline_mode<synchronous>, transform_indices = @transform_2, window_bounds = array<i64: 1, 128>}, {transform_indices = @transform_3, window_bounds = array<i64: 80, 128>}]} {
    %c0 = arith.constant 0 : index
    %c0_0 = arith.constant 0 : index
    %0 = vector.load %arg1[%c0, %c0_0] : memref<80x128xf32, #tpu.memory_space<vmem>>, vector<80x128xf32>
    %c0_1 = arith.constant 0 : index
    %c0_2 = arith.constant 0 : index
    %1 = vector.load %arg2[%c0_1, %c0_2] : memref<1x128xf32, #tpu.memory_space<vmem>>, vector<1x128xf32>
    %2 = vector.broadcast %1 : vector<1x128xf32> to vector<80x128xf32>
    %3 = arith.mulf %0, %2 : vector<80x128xf32>
    %c0_3 = arith.constant 0 : index
    %c0_4 = arith.constant 0 : index
    %4 = vector.load %arg3[%c0_3, %c0_4] : memref<1x128xf32, #tpu.memory_space<vmem>>, vector<1x128xf32>
    %5 = vector.broadcast %4 : vector<1x128xf32> to vector<80x128xf32>
    %6 = arith.addf %3, %5 : vector<80x128xf32>
    %cst = arith.constant 0.000000e+00 : f32
    %7 = vector.broadcast %cst : f32 to vector<80x128xf32>
    %8 = arith.maximumf %6, %7 : vector<80x128xf32>
    %9 = arith.truncf %8 : vector<80x128xf32> to vector<80x128xbf16>
    %c0_5 = arith.constant 0 : index
    %c0_6 = arith.constant 0 : index
    %10 = vector.load %arg4[%c0_5, %c0_6] : memref<80x128xbf16, #tpu.memory_space<vmem>>, vector<80x128xbf16>
    tpu.vector_store %arg4[%c0_5, %c0_6], %9 {strides = array<i32>} : memref<80x128xbf16, #tpu.memory_space<vmem>>, vector<80x128xbf16>,
    return
  }
  func.func @transform_0(%arg0: i32) -> (i32, i32) {
    %c0_i32 = arith.constant 0 : i32
    %c0_i32_0 = arith.constant 0 : i32
    return %arg0, %c0_i32 : i32, i32
  }
  func.func @transform_1(%arg0: i32) -> (i32, i32) {
    %c0_i32 = arith.constant 0 : i32
    %c0_i32_0 = arith.constant 0 : i32
    %c0_i32_1 = arith.constant 0 : i32
    return %c0_i32, %c0_i32_0 : i32, i32
  }
  func.func @transform_2(%arg0: i32) -> (i32, i32) {
    %c0_i32 = arith.constant 0 : i32
    %c0_i32_0 = arith.constant 0 : i32
    %c0_i32_1 = arith.constant 0 : i32
    return %c0_i32, %c0_i32_0 : i32, i32
  }
  func.func @transform_3(%arg0: i32) -> (i32, i32) {
    %c0_i32 = arith.constant 0 : i32
    %c0_i32_0 = arith.constant 0 : i32
    return %arg0, %c0_i32 : i32, i32
  }
}

module attributes {stable_mosaic.version = 11 : i64} {
  func.func @_conv_stats_kernel(%arg0: i32, %arg1: memref<80x256xbf16, #tpu.memory_space<vmem>>, %arg2: memref<256x128xbf16, #tpu.memory_space<vmem>>, %arg3: memref<80x128xf32, #tpu.memory_space<vmem>>, %arg4: memref<1x1x128xf32, #tpu.memory_space<vmem>>, %arg5: memref<1x1x128xf32, #tpu.memory_space<vmem>>) attributes {dimension_semantics = [#tpu.dimension_semantics<parallel>], iteration_bounds = array<i64: 1>, scalar_prefetch = 0 : i64, scratch_operands = 0 : i64, tpu.core_type = #tpu.core_type<tc>, window_params = [{transform_indices = @transform_0, window_bounds = array<i64: 80, 256>}, {pipeline_mode = #tpu.pipeline_mode<synchronous>, transform_indices = @transform_1, window_bounds = array<i64: 256, 128>}, {transform_indices = @transform_2, window_bounds = array<i64: 80, 128>}, {transform_indices = @transform_3, window_bounds = array<i64: 1, 1, 128>}, {transform_indices = @transform_4, window_bounds = array<i64: 1, 1, 128>}]} {
    %c0 = arith.constant 0 : index
    %c0_0 = arith.constant 0 : index
    %0 = vector.load %arg1[%c0, %c0_0] : memref<80x256xbf16, #tpu.memory_space<vmem>>, vector<80x256xbf16>
    %c0_1 = arith.constant 0 : index
    %c0_2 = arith.constant 0 : index
    %1 = vector.load %arg2[%c0_1, %c0_2] : memref<256x128xbf16, #tpu.memory_space<vmem>>, vector<256x128xbf16>
    %cst = arith.constant dense<0.000000e+00> : vector<80x128xf32>
    %2 = tpu.matmul %0, %1, %cst {dimension_numbers = #tpu.dot_dimension_numbers<[1], [0], [0], [1], [0, 0, 1, 1], [], []>} : vector<80x256xbf16>, vector<256x128xbf16>, vector<80x128xf32> -> vector<80x128xf32>
    %c0_3 = arith.constant 0 : index
    %c0_4 = arith.constant 0 : index
    %3 = vector.load %arg3[%c0_3, %c0_4] : memref<80x128xf32, #tpu.memory_space<vmem>>, vector<80x128xf32>
    tpu.vector_store %arg3[%c0_3, %c0_4], %2 {strides = array<i32>} : memref<80x128xf32, #tpu.memory_space<vmem>>, vector<80x128xf32>,
    %cst_5 = arith.constant dense<0.000000e+00> : vector<128xf32>
    %4 = vector.multi_reduction <add>, %2, %cst_5 [0] : vector<80x128xf32> to vector<128xf32>
    %5 = vector.shape_cast %4 : vector<128xf32> to vector<1x128xf32>
    %6 = vector.shape_cast %5 : vector<1x128xf32> to vector<1x1x128xf32>
    %c0_6 = arith.constant 0 : index
    %c0_7 = arith.constant 0 : index
    %c0_8 = arith.constant 0 : index
    %7 = vector.load %arg4[%c0_6, %c0_7, %c0_8] : memref<1x1x128xf32, #tpu.memory_space<vmem>>, vector<1x1x128xf32>
    tpu.vector_store %arg4[%c0_6, %c0_7, %c0_8], %6 {strides = array<i32>} : memref<1x1x128xf32, #tpu.memory_space<vmem>>, vector<1x1x128xf32>,
    %8 = arith.mulf %2, %2 : vector<80x128xf32>
    %cst_9 = arith.constant dense<0.000000e+00> : vector<128xf32>
    %9 = vector.multi_reduction <add>, %8, %cst_9 [0] : vector<80x128xf32> to vector<128xf32>
    %10 = vector.shape_cast %9 : vector<128xf32> to vector<1x128xf32>
    %11 = vector.shape_cast %10 : vector<1x128xf32> to vector<1x1x128xf32>
    %c0_10 = arith.constant 0 : index
    %c0_11 = arith.constant 0 : index
    %c0_12 = arith.constant 0 : index
    %12 = vector.load %arg5[%c0_10, %c0_11, %c0_12] : memref<1x1x128xf32, #tpu.memory_space<vmem>>, vector<1x1x128xf32>
    tpu.vector_store %arg5[%c0_10, %c0_11, %c0_12], %11 {strides = array<i32>} : memref<1x1x128xf32, #tpu.memory_space<vmem>>, vector<1x1x128xf32>,
    return
  }
  func.func @transform_0(%arg0: i32) -> (i32, i32) {
    %c0_i32 = arith.constant 0 : i32
    %c0_i32_0 = arith.constant 0 : i32
    return %arg0, %c0_i32 : i32, i32
  }
  func.func @transform_1(%arg0: i32) -> (i32, i32) {
    %c0_i32 = arith.constant 0 : i32
    %c0_i32_0 = arith.constant 0 : i32
    %c0_i32_1 = arith.constant 0 : i32
    return %c0_i32, %c0_i32_0 : i32, i32
  }
  func.func @transform_2(%arg0: i32) -> (i32, i32) {
    %c0_i32 = arith.constant 0 : i32
    %c0_i32_0 = arith.constant 0 : i32
    return %arg0, %c0_i32 : i32, i32
  }
  func.func @transform_3(%arg0: i32) -> (i32, i32, i32) {
    %c0_i32 = arith.constant 0 : i32
    %c0_i32_0 = arith.constant 0 : i32
    %c0_i32_1 = arith.constant 0 : i32
    return %arg0, %c0_i32, %c0_i32_0 : i32, i32, i32
  }
  func.func @transform_4(%arg0: i32) -> (i32, i32, i32) {
    %c0_i32 = arith.constant 0 : i32
    %c0_i32_0 = arith.constant 0 : i32
    %c0_i32_1 = arith.constant 0 : i32
    return %arg0, %c0_i32, %c0_i32_0 : i32, i32, i32
  }
}

module attributes {stable_mosaic.version = 11 : i64} {
  func.func @_pool_linear_kernel(%arg0: i32, %arg1: memref<8x80xbf16, #tpu.memory_space<vmem>>, %arg2: memref<80x128xbf16, #tpu.memory_space<vmem>>, %arg3: memref<128x128xf32, #tpu.memory_space<vmem>>, %arg4: memref<1x128xf32, #tpu.memory_space<vmem>>, %arg5: memref<8x128xf32, #tpu.memory_space<vmem>>, %arg6: memref<8x128xf32, #tpu.memory_space<vmem>>) attributes {dimension_semantics = [#tpu.dimension_semantics<arbitrary>], iteration_bounds = array<i64: 1>, scalar_prefetch = 0 : i64, scratch_operands = 1 : i64, tpu.core_type = #tpu.core_type<tc>, window_params = [{transform_indices = @transform_0, window_bounds = array<i64: 8, 80>}, {transform_indices = @transform_1, window_bounds = array<i64: 80, 128>}, {pipeline_mode = #tpu.pipeline_mode<synchronous>, transform_indices = @transform_2, window_bounds = array<i64: 128, 128>}, {pipeline_mode = #tpu.pipeline_mode<synchronous>, transform_indices = @transform_3, window_bounds = array<i64: 1, 128>}, {pipeline_mode = #tpu.pipeline_mode<synchronous>, transform_indices = @transform_4, window_bounds = array<i64: 8, 128>}]} {
    %c0_i32 = arith.constant 0 : i32
    %0 = arith.cmpi eq, %arg0, %c0_i32 : i32
    %1 = arith.extui %0 : i1 to i32
    %c0_i32_0 = arith.constant 0 : i32
    %2 = arith.cmpi ne, %1, %c0_i32_0 : i32
    scf.if %2 {
      %cst_10 = arith.constant 0.000000e+00 : f32
      %12 = vector.broadcast %cst_10 : f32 to vector<8x128xf32>
      %c0_11 = arith.constant 0 : index
      %c0_12 = arith.constant 0 : index
      %13 = vector.load %arg6[%c0_11, %c0_12] : memref<8x128xf32, #tpu.memory_space<vmem>>, vector<8x128xf32>
      tpu.vector_store %arg6[%c0_11, %c0_12], %12 {strides = array<i32>} : memref<8x128xf32, #tpu.memory_space<vmem>>, vector<8x128xf32>,
    } else {
    }
    %c0 = arith.constant 0 : index
    %c0_1 = arith.constant 0 : index
    %3 = vector.load %arg6[%c0, %c0_1] : memref<8x128xf32, #tpu.memory_space<vmem>>, vector<8x128xf32>
    %c0_2 = arith.constant 0 : index
    %c0_3 = arith.constant 0 : index
    %4 = vector.load %arg1[%c0_2, %c0_3] : memref<8x80xbf16, #tpu.memory_space<vmem>>, vector<8x80xbf16>
    %c0_4 = arith.constant 0 : index
    %c0_5 = arith.constant 0 : index
    %5 = vector.load %arg2[%c0_4, %c0_5] : memref<80x128xbf16, #tpu.memory_space<vmem>>, vector<80x128xbf16>
    %cst = arith.constant dense<0.000000e+00> : vector<8x128xf32>
    %6 = tpu.matmul %4, %5, %cst {dimension_numbers = #tpu.dot_dimension_numbers<[1], [0], [0], [1], [0, 0, 1, 1], [], []>} : vector<8x80xbf16>, vector<80x128xbf16>, vector<8x128xf32> -> vector<8x128xf32>
    %7 = arith.addf %3, %6 : vector<8x128xf32>
    %c0_6 = arith.constant 0 : index
    %c0_7 = arith.constant 0 : index
    %8 = vector.load %arg6[%c0_6, %c0_7] : memref<8x128xf32, #tpu.memory_space<vmem>>, vector<8x128xf32>
    tpu.vector_store %arg6[%c0_6, %c0_7], %7 {strides = array<i32>} : memref<8x128xf32, #tpu.memory_space<vmem>>, vector<8x128xf32>,
    %c0_i32_8 = arith.constant 0 : i32
    %9 = arith.cmpi eq, %arg0, %c0_i32_8 : i32
    %10 = arith.extui %9 : i1 to i32
    %c0_i32_9 = arith.constant 0 : i32
    %11 = arith.cmpi ne, %10, %c0_i32_9 : i32
    scf.if %11 {
      %c0_10 = arith.constant 0 : index
      %c0_11 = arith.constant 0 : index
      %12 = vector.load %arg6[%c0_10, %c0_11] : memref<8x128xf32, #tpu.memory_space<vmem>>, vector<8x128xf32>
      %c0_12 = arith.constant 0 : index
      %c0_13 = arith.constant 0 : index
      %13 = vector.load %arg3[%c0_12, %c0_13] : memref<128x128xf32, #tpu.memory_space<vmem>>, vector<128x128xf32>
      %cst_14 = arith.constant dense<0.000000e+00> : vector<8x128xf32>
      %14 = tpu.matmul %12, %13, %cst_14 {dimension_numbers = #tpu.dot_dimension_numbers<[1], [0], [0], [1], [0, 0, 1, 1], [], []>} : vector<8x128xf32>, vector<128x128xf32>, vector<8x128xf32> -> vector<8x128xf32>
      %c0_15 = arith.constant 0 : index
      %c0_16 = arith.constant 0 : index
      %15 = vector.load %arg4[%c0_15, %c0_16] : memref<1x128xf32, #tpu.memory_space<vmem>>, vector<1x128xf32>
      %16 = vector.broadcast %15 : vector<1x128xf32> to vector<8x128xf32>
      %17 = arith.addf %14, %16 : vector<8x128xf32>
      %c0_17 = arith.constant 0 : index
      %c0_18 = arith.constant 0 : index
      %18 = vector.load %arg5[%c0_17, %c0_18] : memref<8x128xf32, #tpu.memory_space<vmem>>, vector<8x128xf32>
      tpu.vector_store %arg5[%c0_17, %c0_18], %17 {strides = array<i32>} : memref<8x128xf32, #tpu.memory_space<vmem>>, vector<8x128xf32>,
    } else {
    }
    return
  }
  func.func @transform_0(%arg0: i32) -> (i32, i32) {
    %c0_i32 = arith.constant 0 : i32
    %c0_i32_0 = arith.constant 0 : i32
    return %c0_i32, %arg0 : i32, i32
  }
  func.func @transform_1(%arg0: i32) -> (i32, i32) {
    %c0_i32 = arith.constant 0 : i32
    %c0_i32_0 = arith.constant 0 : i32
    return %arg0, %c0_i32 : i32, i32
  }
  func.func @transform_2(%arg0: i32) -> (i32, i32) {
    %c0_i32 = arith.constant 0 : i32
    %c0_i32_0 = arith.constant 0 : i32
    %c0_i32_1 = arith.constant 0 : i32
    return %c0_i32, %c0_i32_0 : i32, i32
  }
  func.func @transform_3(%arg0: i32) -> (i32, i32) {
    %c0_i32 = arith.constant 0 : i32
    %c0_i32_0 = arith.constant 0 : i32
    %c0_i32_1 = arith.constant 0 : i32
    return %c0_i32, %c0_i32_0 : i32, i32
  }
  func.func @transform_4(%arg0: i32) -> (i32, i32) {
    %c0_i32 = arith.constant 0 : i32
    %c0_i32_0 = arith.constant 0 : i32
    %c0_i32_1 = arith.constant 0 : i32
    return %c0_i32, %c0_i32_0 : i32, i32
  }
}

</mosaic_0001>

<llo_original>
// kernel: _lambda_.6
$region0: #{_lambda_.6}
  #allocation0 [shape = 'u32[]', space=smem, size = 0x4, offset = 0x4, fixed_abs, tag = 'smem constant byte address 0x4 - core index']
  #allocation1 [shape = 'u32[144,128]{1,0:T(1,128)}', space=vmem, size = 0x12000, scoped, tag = 'internal scratch']
  %s0 = inlined_call_operand.vmem [shape: f32[176,128], index: 0, kind: input, shape index: {}]
  %s1 = inlined_call_operand.vmem [shape: f32[1,128], index: 1, kind: input, shape index: {}]
  %s2 = inlined_call_operand.vmem [shape: f32[1,128], index: 2, kind: input, shape index: {}]
  %s3 = inlined_call_operand.vmem [shape: bf16[176,128], index: 3, kind: output, shape index: {}]
  %s4 = sld [smem:[#allocation0]]
  $region22: #{_lambda_.6} parent=0
    _
  %s6 = ssub.s32 1, %s4
  %s7 = scalar_select 0, %s6, %s4
  // Predicated region
  $region2: #{_lambda_.6} parent=0 // pred_check
    _
  $region3: #{_lambda_.6} parent=0 // pred_check_branch
    %9 = sbr.rel (0) target = $region5
  $region4: #{_lambda_.6} parent=0 // pred_region
    _
  $region5: #{_lambda_.6} parent=0 // pred_fallthru
    _
  // Predicated region
  $region6: #{_lambda_.6} parent=0 // pred_check
    _
  $region7: #{_lambda_.6} parent=0 // pred_check_branch
    %11 = sbr.rel (0) target = $region9
  $region8: #{_lambda_.6} parent=0 // pred_region
    _
  $region9: #{_lambda_.6} parent=0 // pred_fallthru
    _
  // Predicated region
  $region10: #{_lambda_.6} parent=0 // pred_check
    _
  $region11: #{_lambda_.6} parent=0 // pred_check_branch
    %13 = sbr.rel (0) target = $region13
  $region12: #{_lambda_.6} parent=0 // pred_region
    _
  $region13: #{_lambda_.6} parent=0 // pred_fallthru
    _
  %v14 = vld [vmem:[%s0] sm:$0xff]
  %v15 = vld [vmem:[%s0 + $0x8] sm:$0xff]
  %v16 = vld [vmem:[%s0 + $0x10] sm:$0xff]
  %v17 = vld [vmem:[%s0 + $0x18] sm:$0xff]
  %v18 = vld [vmem:[%s0 + $0x20] sm:$0xff]
  %v19 = vld [vmem:[%s0 + $0x28] sm:$0xff]
  %v20 = vld [vmem:[%s0 + $0x30] sm:$0xff]
  %v21 = vld [vmem:[%s0 + $0x38] sm:$0xff]
  %v22 = vld [vmem:[%s0 + $0x40] sm:$0xff]
  %v23 = vld [vmem:[%s0 + $0x48] sm:$0xff]
  %v24 = vld [vmem:[%s0 + $0x50] sm:$0xff]
  %v25 = vld [vmem:[%s0 + $0x58] sm:$0xff]
  %v26 = vld [vmem:[%s0 + $0x60] sm:$0xff]
  %v27 = vld [vmem:[%s0 + $0x68] sm:$0xff]
  %v28 = vld [vmem:[%s0 + $0x70] sm:$0xff]
  %v29 = vld [vmem:[%s0 + $0x78] sm:$0xff]
  %v30 = vld [vmem:[%s0 + $0x80] sm:$0xff]
  %v31 = vld [vmem:[%s0 + $0x88] sm:$0xff]
  %v32 = vld [vmem:[%s0 + $0x90] sm:$0xff]
  %v33 = vld [vmem:[%s0 + $0x98] sm:$0xff]
  %v34 = vld [vmem:[%s0 + $0xa0] sm:$0xff]
  %v35 = vld [vmem:[%s0 + $0xa8] sm:$0xff]
  %v36 = vld [vmem:[%s1] sm:$0x1]
  %v38 = vlaneseq
  %v39 = vshrl.u32 %v38, 7
  %v40 = vsub.s32 0, %v39
  %v41 = vrot.slane %v36, %v40
  %v43 = vmul.f32 %v14, %v41
  %v44 = vmul.f32 %v15, %v41
  %v45 = vmul.f32 %v16, %v41
  %v46 = vmul.f32 %v17, %v41
  %v47 = vmul.f32 %v18, %v41
  %v48 = vmul.f32 %v19, %v41
  %v49 = vmul.f32 %v20, %v41
  %v50 = vmul.f32 %v21, %v41
  %v51 = vmul.f32 %v22, %v41
  %v52 = vmul.f32 %v23, %v41
  %v53 = vmul.f32 %v24, %v41
  %v54 = vmul.f32 %v25, %v41
  %v55 = vmul.f32 %v26, %v41
  %v56 = vmul.f32 %v27, %v41
  %v57 = vmul.f32 %v28, %v41
  %v58 = vmul.f32 %v29, %v41
  %v59 = vmul.f32 %v30, %v41
  %v60 = vmul.f32 %v31, %v41
  %v61 = vmul.f32 %v32, %v41
  %v62 = vmul.f32 %v33, %v41
  %v63 = vmul.f32 %v34, %v41
  %v64 = vmul.f32 %v35, %v41
  %v65 = vld [vmem:[%s2] sm:$0x1]
  %v67 = vlaneseq
  %v68 = vshrl.u32 %v67, 7
  %v69 = vsub.s32 0, %v68
  %v70 = vrot.slane %v65, %v69
  %v72 = vadd.f32 %v43, %v70
  %v73 = vadd.f32 %v44, %v70
  %v74 = vadd.f32 %v45, %v70
  %v75 = vadd.f32 %v46, %v70
  %v76 = vadd.f32 %v47, %v70
  %v77 = vadd.f32 %v48, %v70
  %v78 = vadd.f32 %v49, %v70
  %v79 = vadd.f32 %v50, %v70
  %v80 = vadd.f32 %v51, %v70
  %v81 = vadd.f32 %v52, %v70
  %v82 = vadd.f32 %v53, %v70
  %v83 = vadd.f32 %v54, %v70
  %v84 = vadd.f32 %v55, %v70
  %v85 = vadd.f32 %v56, %v70
  %v86 = vadd.f32 %v57, %v70
  %v87 = vadd.f32 %v58, %v70
  %v88 = vadd.f32 %v59, %v70
  %v89 = vadd.f32 %v60, %v70
  %v90 = vadd.f32 %v61, %v70
  %v91 = vadd.f32 %v62, %v70
  %v92 = vadd.f32 %v63, %v70
  %v93 = vadd.f32 %v64, %v70
  %v94 = vmax.f32 %v72, 0.0
  %v95 = vmax.f32 %v73, 0.0
  %v96 = vmax.f32 %v74, 0.0
  %v97 = vmax.f32 %v75, 0.0
  %v98 = vmax.f32 %v76, 0.0
  %v99 = vmax.f32 %v77, 0.0
  %v100 = vmax.f32 %v78, 0.0
  %v101 = vmax.f32 %v79, 0.0
  %v102 = vmax.f32 %v80, 0.0
  %v103 = vmax.f32 %v81, 0.0
  %v104 = vmax.f32 %v82, 0.0
  %v105 = vmax.f32 %v83, 0.0
  %v106 = vmax.f32 %v84, 0.0
  %v107 = vmax.f32 %v85, 0.0
  %v108 = vmax.f32 %v86, 0.0
  %v109 = vmax.f32 %v87, 0.0
  %v110 = vmax.f32 %v88, 0.0
  %v111 = vmax.f32 %v89, 0.0
  %v112 = vmax.f32 %v90, 0.0
  %v113 = vmax.f32 %v91, 0.0
  %v114 = vmax.f32 %v92, 0.0
  %v115 = vmax.f32 %v93, 0.0
  %v116 = vpack.c.bf16 %v95, %v94
  %v117 = vpack.c.bf16 %v97, %v96
  %v118 = vpack.c.bf16 %v99, %v98
  %v119 = vpack.c.bf16 %v101, %v100
  %v120 = vpack.c.bf16 %v103, %v102
  %v121 = vpack.c.bf16 %v105, %v104
  %v122 = vpack.c.bf16 %v107, %v106
  %v123 = vpack.c.bf16 %v109, %v108
  %v124 = vpack.c.bf16 %v111, %v110
  %v125 = vpack.c.bf16 %v113, %v112
  %v126 = vpack.c.bf16 %v115, %v114
  %v138 = vunpack.c.l.b16 %v116
  %v139 = vunpack.c.h.b16 %v116
  %v140 = vunpack.c.l.b16 %v117
  %v141 = vunpack.c.h.b16 %v117
  %v142 = vunpack.c.l.b16 %v118
  %v143 = vunpack.c.h.b16 %v118
  %v144 = vunpack.c.l.b16 %v119
  %v145 = vunpack.c.h.b16 %v119
  %v146 = vunpack.c.l.b16 %v120
  %v147 = vunpack.c.h.b16 %v120
  %v148 = vunpack.c.l.b16 %v121
  %v149 = vunpack.c.h.b16 %v121
  %v150 = vunpack.c.l.b16 %v122
  %v151 = vunpack.c.h.b16 %v122
  %v152 = vunpack.c.l.b16 %v123
  %v153 = vunpack.c.h.b16 %v123
  %v154 = vunpack.c.l.b16 %v124
  %v155 = vunpack.c.h.b16 %v124
  %v156 = vunpack.c.l.b16 %v125
  %v157 = vunpack.c.h.b16 %v125
  %v158 = vunpack.c.l.b16 %v126
  %v159 = vunpack.c.h.b16 %v126
  %v160 = vpack.c.b16 %v138, %v138
  %v161 = vpack.c.b16 %v139, %v139
  %v162 = vpack.c.b16 %v140, %v140
  %v163 = vpack.c.b16 %v141, %v141
  %v164 = vpack.c.b16 %v142, %v142
  %v165 = vpack.c.b16 %v143, %v143
  %v166 = vpack.c.b16 %v144, %v144
  %v167 = vpack.c.b16 %v145, %v145
  %v168 = vpack.c.b16 %v146, %v146
  %v169 = vpack.c.b16 %v147, %v147
  %v170 = vpack.c.b16 %v148, %v148
  %v171 = vpack.c.b16 %v149, %v149
  %v172 = vpack.c.b16 %v150, %v150
  %v173 = vpack.c.b16 %v151, %v151
  %v174 = vpack.c.b16 %v152, %v152
  %v175 = vpack.c.b16 %v153, %v153
  %v176 = vpack.c.b16 %v154, %v154
  %v177 = vpack.c.b16 %v155, %v155
  %v178 = vpack.c.b16 %v156, %v156
  %v179 = vpack.c.b16 %v157, %v157
  %v180 = vpack.c.b16 %v158, %v158
  %v181 = vpack.c.b16 %v159, %v159
  %204 = vst [vmem:[%s3] sm:$0xf] %v160
  %205 = vst [vmem:[%s3 + $0x4] sm:$0xf] %v161
  %206 = vst [vmem:[%s3 + $0x8] sm:$0xf] %v162
  %207 = vst [vmem:[%s3 + $0xc] sm:$0xf] %v163
  %208 = vst [vmem:[%s3 + $0x10] sm:$0xf] %v164
  %209 = vst [vmem:[%s3 + $0x14] sm:$0xf] %v165
  %210 = vst [vmem:[%s3 + $0x18] sm:$0xf] %v166
  %211 = vst [vmem:[%s3 + $0x1c] sm:$0xf] %v167
  %212 = vst [vmem:[%s3 + $0x20] sm:$0xf] %v168
  %213 = vst [vmem:[%s3 + $0x24] sm:$0xf] %v169
  %214 = vst [vmem:[%s3 + $0x28] sm:$0xf] %v170
  %215 = vst [vmem:[%s3 + $0x2c] sm:$0xf] %v171
  %216 = vst [vmem:[%s3 + $0x30] sm:$0xf] %v172
  %217 = vst [vmem:[%s3 + $0x34] sm:$0xf] %v173
  %218 = vst [vmem:[%s3 + $0x38] sm:$0xf] %v174
  %219 = vst [vmem:[%s3 + $0x3c] sm:$0xf] %v175
  %220 = vst [vmem:[%s3 + $0x40] sm:$0xf] %v176
  %221 = vst [vmem:[%s3 + $0x44] sm:$0xf] %v177
  %222 = vst [vmem:[%s3 + $0x48] sm:$0xf] %v178
  %223 = vst [vmem:[%s3 + $0x4c] sm:$0xf] %v179
  %224 = vst [vmem:[%s3 + $0x50] sm:$0xf] %v180
  %225 = vst [vmem:[%s3 + $0x54] sm:$0xf] %v181
  // Predicated region
  $region14: #{_lambda_.6} parent=0 // pred_check
    _
  $region15: #{_lambda_.6} parent=0 // pred_check_branch
    %227 = sbr.rel (0) target = $region17
  $region16: #{_lambda_.6} parent=0 // pred_region
    _
  $region17: #{_lambda_.6} parent=0 // pred_fallthru
    _
  // Predicated region
  $region18: #{_lambda_.6} parent=0 // pred_check
    _
  $region19: #{_lambda_.6} parent=0 // pred_check_branch
    %229 = sbr.rel (0) target = $region21
  $region20: #{_lambda_.6} parent=0 // pred_region
    _
  $region21: #{_lambda_.6} parent=0 // pred_fallthru
    _

// kernel: _lambda_.5
$region0: #{_lambda_.5}
  #allocation0 [shape = 'u32[]', space=smem, size = 0x4, offset = 0x4, fixed_abs, tag = 'smem constant byte address 0x4 - core index']
  #allocation1 [shape = 'u32[144,128]{1,0:T(1,128)}', space=vmem, size = 0x12000, scoped, tag = 'internal scratch']
  %s0 = inlined_call_operand.vmem [shape: bf16[176,128], index: 0, kind: input, shape index: {}]
  %s1 = inlined_call_operand.vmem [shape: bf16[128,128], index: 1, kind: input, shape index: {}]
  %s2 = inlined_call_operand.vmem [shape: f32[176,128], index: 2, kind: output, shape index: {0}]
  %s3 = inlined_call_operand.vmem [shape: f32[1,1,128], index: 3, kind: output, shape index: {1}]
  %s4 = inlined_call_operand.vmem [shape: f32[1,1,128], index: 4, kind: output, shape index: {2}]
  %5 = xla_tuple %s2, %s3, %s4
  %s6 = sld [smem:[#allocation0]]
  $region34: #{_lambda_.5} parent=0
    _
  %s8 = ssub.s32 1, %s6
  %s9 = scalar_select 0, %s8, %s6
  // Predicated region
  $region2: #{_lambda_.5} parent=0 // pred_check
    _
  $region3: #{_lambda_.5} parent=0 // pred_check_branch
    %11 = sbr.rel (0) target = $region5
  $region4: #{_lambda_.5} parent=0 // pred_region
    _
  $region5: #{_lambda_.5} parent=0 // pred_fallthru
    _
  // Predicated region
  $region6: #{_lambda_.5} parent=0 // pred_check
    _
  $region7: #{_lambda_.5} parent=0 // pred_check_branch
    %13 = sbr.rel (0) target = $region9
  $region8: #{_lambda_.5} parent=0 // pred_region
    _
  $region9: #{_lambda_.5} parent=0 // pred_fallthru
    _
  %v15 = vld [vmem:[%s0] sm:$0xf]
  %v16 = vld [vmem:[%s0 + $0x4] sm:$0xf]
  %v17 = vld [vmem:[%s0 + $0x8] sm:$0xf]
  %v18 = vld [vmem:[%s0 + $0xc] sm:$0xf]
  %v19 = vld [vmem:[%s0 + $0x10] sm:$0xf]
  %v20 = vld [vmem:[%s0 + $0x14] sm:$0xf]
  %v21 = vld [vmem:[%s0 + $0x18] sm:$0xf]
  %v22 = vld [vmem:[%s0 + $0x1c] sm:$0xf]
  %v23 = vld [vmem:[%s0 + $0x20] sm:$0xf]
  %v24 = vld [vmem:[%s0 + $0x24] sm:$0xf]
  %v25 = vld [vmem:[%s0 + $0x28] sm:$0xf]
  %v26 = vld [vmem:[%s0 + $0x2c] sm:$0xf]
  %v27 = vld [vmem:[%s0 + $0x30] sm:$0xf]
  %v28 = vld [vmem:[%s0 + $0x34] sm:$0xf]
  %v29 = vld [vmem:[%s0 + $0x38] sm:$0xf]
  %v30 = vld [vmem:[%s0 + $0x3c] sm:$0xf]
  %v31 = vld [vmem:[%s0 + $0x40] sm:$0xf]
  %v32 = vld [vmem:[%s0 + $0x44] sm:$0xf]
  %v33 = vld [vmem:[%s0 + $0x48] sm:$0xf]
  %v34 = vld [vmem:[%s0 + $0x4c] sm:$0xf]
  %v35 = vld [vmem:[%s0 + $0x50] sm:$0xf]
  %v36 = vld [vmem:[%s0 + $0x54] sm:$0xf]
  %v37 = vld [vmem:[%s1] sm:$0xf]
  %v38 = vld [vmem:[%s1 + $0x4] sm:$0xf]
  %v39 = vld [vmem:[%s1 + $0x8] sm:$0xf]
  %v40 = vld [vmem:[%s1 + $0xc] sm:$0xf]
  %v41 = vld [vmem:[%s1 + $0x10] sm:$0xf]
  %v42 = vld [vmem:[%s1 + $0x14] sm:$0xf]
  %v43 = vld [vmem:[%s1 + $0x18] sm:$0xf]
  %v44 = vld [vmem:[%s1 + $0x1c] sm:$0xf]
  %v45 = vld [vmem:[%s1 + $0x20] sm:$0xf]
  %v46 = vld [vmem:[%s1 + $0x24] sm:$0xf]
  %v47 = vld [vmem:[%s1 + $0x28] sm:$0xf]
  %v48 = vld [vmem:[%s1 + $0x2c] sm:$0xf]
  %v49 = vld [vmem:[%s1 + $0x30] sm:$0xf]
  %v50 = vld [vmem:[%s1 + $0x34] sm:$0xf]
  %v51 = vld [vmem:[%s1 + $0x38] sm:$0xf]
  %v52 = vld [vmem:[%s1 + $0x3c] sm:$0xf]
  %v75 = vunpack.c.l.b16 %v15
  %v76 = vunpack.c.l.b16 %v16
  %v77 = vunpack.c.l.b16 %v17
  %v78 = vunpack.c.l.b16 %v18
  %v79 = vunpack.c.l.b16 %v19
  %v80 = vunpack.c.l.b16 %v20
  %v81 = vunpack.c.l.b16 %v21
  %v82 = vunpack.c.l.b16 %v22
  %v83 = vunpack.c.l.b16 %v23
  %v84 = vunpack.c.l.b16 %v24
  %v85 = vunpack.c.l.b16 %v25
  %v86 = vunpack.c.l.b16 %v26
  %v87 = vunpack.c.l.b16 %v27
  %v88 = vunpack.c.l.b16 %v28
  %v89 = vunpack.c.l.b16 %v29
  %v90 = vunpack.c.l.b16 %v30
  %v91 = vunpack.c.l.b16 %v31
  %v92 = vunpack.c.l.b16 %v32
  %v93 = vunpack.c.l.b16 %v33
  %v94 = vunpack.c.l.b16 %v34
  %v95 = vunpack.c.l.b16 %v35
  %v96 = vunpack.c.l.b16 %v36
  %v97 = vpack.c.b16 %v76, %v75
  %v98 = vpack.c.b16 %v78, %v77
  %v99 = vpack.c.b16 %v80, %v79
  %v100 = vpack.c.b16 %v82, %v81
  %v101 = vpack.c.b16 %v84, %v83
  %v102 = vpack.c.b16 %v86, %v85
  %v103 = vpack.c.b16 %v88, %v87
  %v104 = vpack.c.b16 %v90, %v89
  %v105 = vpack.c.b16 %v92, %v91
  %v106 = vpack.c.b16 %v94, %v93
  %v107 = vpack.c.b16 %v96, %v95
  %v135 = vunpack.c.l.b16 %v37
  %v136 = vunpack.c.l.b16 %v38
  %v137 = vunpack.c.l.b16 %v39
  %v138 = vunpack.c.l.b16 %v40
  %v139 = vunpack.c.l.b16 %v41
  %v140 = vunpack.c.l.b16 %v42
  %v141 = vunpack.c.l.b16 %v43
  %v142 = vunpack.c.l.b16 %v44
  %v143 = vunpack.c.l.b16 %v45
  %v144 = vunpack.c.l.b16 %v46
  %v145 = vunpack.c.l.b16 %v47
  %v146 = vunpack.c.l.b16 %v48
  %v147 = vunpack.c.l.b16 %v49
  %v148 = vunpack.c.l.b16 %v50
  %v149 = vunpack.c.l.b16 %v51
  %v150 = vunpack.c.l.b16 %v52
  %v151 = vpack.c.b16 %v136, %v135
  %v152 = vpack.c.b16 %v138, %v137
  %v153 = vpack.c.b16 %v140, %v139
  %v154 = vpack.c.b16 %v142, %v141
  %v155 = vpack.c.b16 %v144, %v143
  %v156 = vpack.c.b16 %v146, %v145
  %v157 = vpack.c.b16 %v148, %v147
  %v158 = vpack.c.b16 %v150, %v149
  %167 = vmatprep.subr.bf16.mxu0 0
  %168 = vmatpush1.bf16.msra.mxu0 %v151
  %169 = vmatprep.subr.bf16.mxu0 0
  %170 = vmatpush1.bf16.msra.mxu0 %v152
  %171 = vmatprep.subr.bf16.mxu0 0
  %172 = vmatpush1.bf16.msra.mxu0 %v153
  %173 = vmatprep.subr.bf16.mxu0 0
  %174 = vmatpush1.bf16.msra.mxu0 %v154
  %175 = vmatprep.subr.bf16.mxu0 0
  %176 = vmatpush1.bf16.msra.mxu0 %v155
  %177 = vmatprep.subr.bf16.mxu0 0
  %178 = vmatpush1.bf16.msra.mxu0 %v156
  %179 = vmatprep.subr.bf16.mxu0 0
  %180 = vmatpush1.bf16.msra.mxu0 %v157
  %181 = vmatprep.subr.bf16.mxu0 0
  %182 = vmatpush1.bf16.msra.mxu0 %v158
  %183 = vmatprep.subr.bf16.mxu0 0
  %184 = vmatpush1.bf16.msra.mxu0 0
  %185 = vmatprep.subr.bf16.mxu0 0
  %186 = vmatpush1.bf16.msra.mxu0 0
  %187 = vmatprep.subr.bf16.mxu0 0
  %188 = vmatpush1.bf16.msra.mxu0 0
  %189 = vmatprep.subr.bf16.mxu0 0
  %190 = vmatpush1.bf16.msra.mxu0 0
  %191 = vmatprep.subr.bf16.mxu0 0
  %192 = vmatpush1.bf16.msra.mxu0 0
  %193 = vmatprep.subr.bf16.mxu0 0
  %194 = vmatpush1.bf16.msra.mxu0 0
  %195 = vmatprep.subr.bf16.mxu0 0
  %196 = vmatpush1.bf16.msra.mxu0 0
  %197 = vmatprep.subr.bf16.mxu0 0
  %198 = vmatpush1.bf16.msra.mxu0 0
  %199 = vmatprep.mubr.bf16.mxu0 0
  %200 = vmatmul.mubr.bf16.gmra.mrb[0].mxu0 %v97
  %v201 = vpop.f32.mrb[0].mxu0
  %v202 = vadd.f32 0.0, %v201
  %v203 = vpop.f32.mrb[0].mxu0
  %v204 = vpop.f32.mrb[0].mxu0
  %v205 = vadd.f32 0.0, %v204
  %v206 = vpop.f32.mrb[0].mxu0
  %207 = vmatprep.mubr.bf16.mxu0 0
  %208 = vmatmul.mubr.bf16.gmra.mrb[0].mxu0 %v98
  %v209 = vpop.f32.mrb[0].mxu0
  %v210 = vadd.f32 0.0, %v209
  %v211 = vpop.f32.mrb[0].mxu0
  %v212 = vpop.f32.mrb[0].mxu0
  %v213 = vadd.f32 0.0, %v212
  %v214 = vpop.f32.mrb[0].mxu0
  %215 = vmatprep.mubr.bf16.mxu0 0
  %216 = vmatmul.mubr.bf16.gmra.mrb[0].mxu0 %v99
  %v217 = vpop.f32.mrb[0].mxu0
  %v218 = vadd.f32 0.0, %v217
  %v219 = vpop.f32.mrb[0].mxu0
  %v220 = vpop.f32.mrb[0].mxu0
  %v221 = vadd.f32 0.0, %v220
  %v222 = vpop.f32.mrb[0].mxu0
  %223 = vmatprep.mubr.bf16.mxu0 0
  %224 = vmatmul.mubr.bf16.gmra.mrb[0].mxu0 %v100
  %v225 = vpop.f32.mrb[0].mxu0
  %v226 = vadd.f32 0.0, %v225
  %v227 = vpop.f32.mrb[0].mxu0
  %v228 = vpop.f32.mrb[0].mxu0
  %v229 = vadd.f32 0.0, %v228
  %v230 = vpop.f32.mrb[0].mxu0
  %231 = vmatprep.mubr.bf16.mxu0 0
  %232 = vmatmul.mubr.bf16.gmra.mrb[0].mxu0 %v101
  %v233 = vpop.f32.mrb[0].mxu0
  %v234 = vadd.f32 0.0, %v233
  %v235 = vpop.f32.mrb[0].mxu0
  %v236 = vpop.f32.mrb[0].mxu0
  %v237 = vadd.f32 0.0, %v236
  %v238 = vpop.f32.mrb[0].mxu0
  %239 = vmatprep.mubr.bf16.mxu0 0
  %240 = vmatmul.mubr.bf16.gmra.mrb[0].mxu0 %v102
  %v241 = vpop.f32.mrb[0].mxu0
  %v242 = vadd.f32 0.0, %v241
  %v243 = vpop.f32.mrb[0].mxu0
  %v244 = vpop.f32.mrb[0].mxu0
  %v245 = vadd.f32 0.0, %v244
  %v246 = vpop.f32.mrb[0].mxu0
  %247 = vmatprep.mubr.bf16.mxu0 0
  %248 = vmatmul.mubr.bf16.gmra.mrb[0].mxu0 %v103
  %v249 = vpop.f32.mrb[0].mxu0
  %v250 = vadd.f32 0.0, %v249
  %v251 = vpop.f32.mrb[0].mxu0
  %v252 = vpop.f32.mrb[0].mxu0
  %v253 = vadd.f32 0.0, %v252
  %v254 = vpop.f32.mrb[0].mxu0
  %255 = vmatprep.mubr.bf16.mxu0 0
  %256 = vmatmul.mubr.bf16.gmra.mrb[0].mxu0 %v104
  %v257 = vpop.f32.mrb[0].mxu0
  %v258 = vadd.f32 0.0, %v257
  %v259 = vpop.f32.mrb[0].mxu0
  %v260 = vpop.f32.mrb[0].mxu0
  %v261 = vadd.f32 0.0, %v260
  %v262 = vpop.f32.mrb[0].mxu0
  %263 = vmatprep.mubr.bf16.mxu0 0
  %264 = vmatmul.mubr.bf16.gmra.mrb[0].mxu0 %v105
  %v265 = vpop.f32.mrb[0].mxu0
  %v266 = vadd.f32 0.0, %v265
  %v267 = vpop.f32.mrb[0].mxu0
  %v268 = vpop.f32.mrb[0].mxu0
  %v269 = vadd.f32 0.0, %v268
  %v270 = vpop.f32.mrb[0].mxu0
  %271 = vmatprep.mubr.bf16.mxu0 0
  %272 = vmatmul.mubr.bf16.gmra.mrb[0].mxu0 %v106
  %v273 = vpop.f32.mrb[0].mxu0
  %v274 = vadd.f32 0.0, %v273
  %v275 = vpop.f32.mrb[0].mxu0
  %v276 = vpop.f32.mrb[0].mxu0
  %v277 = vadd.f32 0.0, %v276
  %v278 = vpop.f32.mrb[0].mxu0
  %279 = vmatprep.mubr.bf16.mxu0 0
  %280 = vmatmul.mubr.bf16.gmra.mrb[0].mxu0 %v107
  %v281 = vpop.f32.mrb[0].mxu0
  %v282 = vadd.f32 0.0, %v281
  %v283 = vpop.f32.mrb[0].mxu0
  %v284 = vpop.f32.mrb[0].mxu0
  %v285 = vadd.f32 0.0, %v284
  %v286 = vpop.f32.mrb[0].mxu0
  %287 = vdwg.mxu0
  %288 = vst [vmem:[%s2] sm:$0xff] %v202
  %289 = vst [vmem:[%s2 + $0x8] sm:$0xff] %v205
  %290 = vst [vmem:[%s2 + $0x10] sm:$0xff] %v210
  %291 = vst [vmem:[%s2 + $0x18] sm:$0xff] %v213
  %292 = vst [vmem:[%s2 + $0x20] sm:$0xff] %v218
  %293 = vst [vmem:[%s2 + $0x28] sm:$0xff] %v221
  %294 = vst [vmem:[%s2 + $0x30] sm:$0xff] %v226
  %295 = vst [vmem:[%s2 + $0x38] sm:$0xff] %v229
  %296 = vst [vmem:[%s2 + $0x40] sm:$0xff] %v234
  %297 = vst [vmem:[%s2 + $0x48] sm:$0xff] %v237
  %298 = vst [vmem:[%s2 + $0x50] sm:$0xff] %v242
  %299 = vst [vmem:[%s2 + $0x58] sm:$0xff] %v245
  %300 = vst [vmem:[%s2 + $0x60] sm:$0xff] %v250
  %301 = vst [vmem:[%s2 + $0x68] sm:$0xff] %v253
  %302 = vst [vmem:[%s2 + $0x70] sm:$0xff] %v258
  %303 = vst [vmem:[%s2 + $0x78] sm:$0xff] %v261
  %304 = vst [vmem:[%s2 + $0x80] sm:$0xff] %v266
  %305 = vst [vmem:[%s2 + $0x88] sm:$0xff] %v269
  %306 = vst [vmem:[%s2 + $0x90] sm:$0xff] %v274
  %307 = vst [vmem:[%s2 + $0x98] sm:$0xff] %v277
  %308 = vst [vmem:[%s2 + $0xa0] sm:$0xff] %v282
  %309 = vst [vmem:[%s2 + $0xa8] sm:$0xff] %v285
  %v310 = vadd.f32 %v202, %v205
  %v311 = vadd.f32 %v310, %v210
  %v312 = vadd.f32 %v311, %v213
  %v313 = vadd.f32 %v312, %v218
  %v314 = vadd.f32 %v313, %v221
  %v315 = vadd.f32 %v314, %v226
  %v316 = vadd.f32 %v315, %v229
  %v317 = vadd.f32 %v316, %v234
  %v318 = vadd.f32 %v317, %v237
  %v319 = vadd.f32 %v318, %v242
  %v320 = vadd.f32 %v319, %v245
  %v321 = vadd.f32 %v320, %v250
  %v322 = vadd.f32 %v321, %v253
  %v323 = vadd.f32 %v322, %v258
  %v324 = vadd.f32 %v323, %v261
  %v325 = vadd.f32 %v324, %v266
  %v326 = vadd.f32 %v325, %v269
  %v327 = vadd.f32 %v326, %v274
  %v328 = vadd.f32 %v327, %v277
  %v329 = vadd.f32 %v328, %v282
  %v330 = vadd.f32 %v329, %v285
  %v331 = vrot.slane %v330, 4
  %v332 = vadd.f32 %v330, %v331
  %v333 = vrot.slane %v332, 2
  %v334 = vadd.f32 %v332, %v333
  %v335 = vrot.slane %v334, 1
  %v336 = vadd.f32 %v334, %v335
  %337 = vst [vmem:[%s3] sm:$0x1] %v336
  %v338 = vmul.f32 %v202, %v202
  %v339 = vmul.f32 %v205, %v205
  %v340 = vmul.f32 %v210, %v210
  %v341 = vmul.f32 %v213, %v213
  %v342 = vmul.f32 %v218, %v218
  %v343 = vmul.f32 %v221, %v221
  %v344 = vmul.f32 %v226, %v226
  %v345 = vmul.f32 %v229, %v229
  %v346 = vmul.f32 %v234, %v234
  %v347 = vmul.f32 %v237, %v237
  %v348 = vmul.f32 %v242, %v242
  %v349 = vmul.f32 %v245, %v245
  %v350 = vmul.f32 %v250, %v250
  %v351 = vmul.f32 %v253, %v253
  %v352 = vmul.f32 %v258, %v258
  %v353 = vmul.f32 %v261, %v261
  %v354 = vmul.f32 %v266, %v266
  %v355 = vmul.f32 %v269, %v269
  %v356 = vmul.f32 %v274, %v274
  %v357 = vmul.f32 %v277, %v277
  %v358 = vmul.f32 %v282, %v282
  %v359 = vmul.f32 %v285, %v285
  %v360 = vadd.f32 %v338, %v339
  %v361 = vadd.f32 %v360, %v340
  %v362 = vadd.f32 %v361, %v341
  %v363 = vadd.f32 %v362, %v342
  %v364 = vadd.f32 %v363, %v343
  %v365 = vadd.f32 %v364, %v344
  %v366 = vadd.f32 %v365, %v345
  %v367 = vadd.f32 %v366, %v346
  %v368 = vadd.f32 %v367, %v347
  %v369 = vadd.f32 %v368, %v348
  %v370 = vadd.f32 %v369, %v349
  %v371 = vadd.f32 %v370, %v350
  %v372 = vadd.f32 %v371, %v351
  %v373 = vadd.f32 %v372, %v352
  %v374 = vadd.f32 %v373, %v353
  %v375 = vadd.f32 %v374, %v354
  %v376 = vadd.f32 %v375, %v355
  %v377 = vadd.f32 %v376, %v356
  %v378 = vadd.f32 %v377, %v357
  %v379 = vadd.f32 %v378, %v358
  %v380 = vadd.f32 %v379, %v359
  %v381 = vrot.slane %v380, 4
  %v382 = vadd.f32 %v380, %v381
  %v383 = vrot.slane %v382, 2
  %v384 = vadd.f32 %v382, %v383
  %v385 = vrot.slane %v384, 1
  %v386 = vadd.f32 %v384, %v385
  %387 = vst [vmem:[%s4] sm:$0x1] %v386
  // Predicated region
  $region10: #{_lambda_.5} parent=0 // pred_check
    _
  $region11: #{_lambda_.5} parent=0 // pred_check_branch
    %389 = sbr.rel (0) target = $region13
  $region12: #{_lambda_.5} parent=0 // pred_region
    _
  $region13: #{_lambda_.5} parent=0 // pred_fallthru
    _
  // Predicated region
  $region14: #{_lambda_.5} parent=0 // pred_check
    _
  $region15: #{_lambda_.5} parent=0 // pred_check_branch
    %391 = sbr.rel (0) target = $region17
  $region16: #{_lambda_.5} parent=0 // pred_region
    _
  $region17: #{_lambda_.5} parent=0 // pred_fallthru
    _
  // Predicated region
  $region18: #{_lambda_.5} parent=0 // pred_check
    _
  $region19: #{_lambda_.5} parent=0 // pred_check_branch
    %393 = sbr.rel (0) target = $region21
  $region20: #{_lambda_.5} parent=0 // pred_region
    _
  $region21: #{_lambda_.5} parent=0 // pred_fallthru
    _
  // Predicated region
  $region22: #{_lambda_.5} parent=0 // pred_check
    _
  $region23: #{_lambda_.5} parent=0 // pred_check_branch
    %395 = sbr.rel (0) target = $region25
  $region24: #{_lambda_.5} parent=0 // pred_region
    _
  $region25: #{_lambda_.5} parent=0 // pred_fallthru
    _
  // Predicated region
  $region26: #{_lambda_.5} parent=0 // pred_check
    _
  $region27: #{_lambda_.5} parent=0 // pred_check_branch
    %397 = sbr.rel (0) target = $region29
  $region28: #{_lambda_.5} parent=0 // pred_region
    _
  $region29: #{_lambda_.5} parent=0 // pred_fallthru
    _
  // Predicated region
  $region30: #{_lambda_.5} parent=0 // pred_check
    _
  $region31: #{_lambda_.5} parent=0 // pred_check_branch
    %399 = sbr.rel (0) target = $region33
  $region32: #{_lambda_.5} parent=0 // pred_region
    _
  $region33: #{_lambda_.5} parent=0 // pred_fallthru
    _

// kernel: _lambda_.8
$region0: #{_lambda_.8}
  #allocation0 [shape = 'u32[]', space=smem, size = 0x4, offset = 0x4, fixed_abs, tag = 'smem constant byte address 0x4 - core index']
  #allocation1 [shape = 'u32[144,128]{1,0:T(1,128)}', space=vmem, size = 0x12000, scoped, tag = 'internal scratch']
  %s0 = inlined_call_operand.vmem [shape: f32[80,128], index: 0, kind: input, shape index: {}]
  %s1 = inlined_call_operand.vmem [shape: f32[1,128], index: 1, kind: input, shape index: {}]
  %s2 = inlined_call_operand.vmem [shape: f32[1,128], index: 2, kind: input, shape index: {}]
  %s3 = inlined_call_operand.vmem [shape: bf16[80,128], index: 3, kind: output, shape index: {}]
  %s4 = sld [smem:[#allocation0]]
  $region22: #{_lambda_.8} parent=0
    _
  %s6 = ssub.s32 1, %s4
  %s7 = scalar_select 0, %s6, %s4
  // Predicated region
  $region2: #{_lambda_.8} parent=0 // pred_check
    _
  $region3: #{_lambda_.8} parent=0 // pred_check_branch
    %9 = sbr.rel (0) target = $region5
  $region4: #{_lambda_.8} parent=0 // pred_region
    _
  $region5: #{_lambda_.8} parent=0 // pred_fallthru
    _
  // Predicated region
  $region6: #{_lambda_.8} parent=0 // pred_check
    _
  $region7: #{_lambda_.8} parent=0 // pred_check_branch
    %11 = sbr.rel (0) target = $region9
  $region8: #{_lambda_.8} parent=0 // pred_region
    _
  $region9: #{_lambda_.8} parent=0 // pred_fallthru
    _
  // Predicated region
  $region10: #{_lambda_.8} parent=0 // pred_check
    _
  $region11: #{_lambda_.8} parent=0 // pred_check_branch
    %13 = sbr.rel (0) target = $region13
  $region12: #{_lambda_.8} parent=0 // pred_region
    _
  $region13: #{_lambda_.8} parent=0 // pred_fallthru
    _
  %v14 = vld [vmem:[%s0] sm:$0xff]
  %v15 = vld [vmem:[%s0 + $0x8] sm:$0xff]
  %v16 = vld [vmem:[%s0 + $0x10] sm:$0xff]
  %v17 = vld [vmem:[%s0 + $0x18] sm:$0xff]
  %v18 = vld [vmem:[%s0 + $0x20] sm:$0xff]
  %v19 = vld [vmem:[%s0 + $0x28] sm:$0xff]
  %v20 = vld [vmem:[%s0 + $0x30] sm:$0xff]
  %v21 = vld [vmem:[%s0 + $0x38] sm:$0xff]
  %v22 = vld [vmem:[%s0 + $0x40] sm:$0xff]
  %v23 = vld [vmem:[%s0 + $0x48] sm:$0xff]
  %v24 = vld [vmem:[%s1] sm:$0x1]
  %v26 = vlaneseq
  %v27 = vshrl.u32 %v26, 7
  %v28 = vsub.s32 0, %v27
  %v29 = vrot.slane %v24, %v28
  %v31 = vmul.f32 %v14, %v29
  %v32 = vmul.f32 %v15, %v29
  %v33 = vmul.f32 %v16, %v29
  %v34 = vmul.f32 %v17, %v29
  %v35 = vmul.f32 %v18, %v29
  %v36 = vmul.f32 %v19, %v29
  %v37 = vmul.f32 %v20, %v29
  %v38 = vmul.f32 %v21, %v29
  %v39 = vmul.f32 %v22, %v29
  %v40 = vmul.f32 %v23, %v29
  %v41 = vld [vmem:[%s2] sm:$0x1]
  %v43 = vlaneseq
  %v44 = vshrl.u32 %v43, 7
  %v45 = vsub.s32 0, %v44
  %v46 = vrot.slane %v41, %v45
  %v48 = vadd.f32 %v31, %v46
  %v49 = vadd.f32 %v32, %v46
  %v50 = vadd.f32 %v33, %v46
  %v51 = vadd.f32 %v34, %v46
  %v52 = vadd.f32 %v35, %v46
  %v53 = vadd.f32 %v36, %v46
  %v54 = vadd.f32 %v37, %v46
  %v55 = vadd.f32 %v38, %v46
  %v56 = vadd.f32 %v39, %v46
  %v57 = vadd.f32 %v40, %v46
  %v58 = vmax.f32 %v48, 0.0
  %v59 = vmax.f32 %v49, 0.0
  %v60 = vmax.f32 %v50, 0.0
  %v61 = vmax.f32 %v51, 0.0
  %v62 = vmax.f32 %v52, 0.0
  %v63 = vmax.f32 %v53, 0.0
  %v64 = vmax.f32 %v54, 0.0
  %v65 = vmax.f32 %v55, 0.0
  %v66 = vmax.f32 %v56, 0.0
  %v67 = vmax.f32 %v57, 0.0
  %v68 = vpack.c.bf16 %v59, %v58
  %v69 = vpack.c.bf16 %v61, %v60
  %v70 = vpack.c.bf16 %v63, %v62
  %v71 = vpack.c.bf16 %v65, %v64
  %v72 = vpack.c.bf16 %v67, %v66
  %v78 = vunpack.c.l.b16 %v68
  %v79 = vunpack.c.h.b16 %v68
  %v80 = vunpack.c.l.b16 %v69
  %v81 = vunpack.c.h.b16 %v69
  %v82 = vunpack.c.l.b16 %v70
  %v83 = vunpack.c.h.b16 %v70
  %v84 = vunpack.c.l.b16 %v71
  %v85 = vunpack.c.h.b16 %v71
  %v86 = vunpack.c.l.b16 %v72
  %v87 = vunpack.c.h.b16 %v72
  %v88 = vpack.c.b16 %v78, %v78
  %v89 = vpack.c.b16 %v79, %v79
  %v90 = vpack.c.b16 %v80, %v80
  %v91 = vpack.c.b16 %v81, %v81
  %v92 = vpack.c.b16 %v82, %v82
  %v93 = vpack.c.b16 %v83, %v83
  %v94 = vpack.c.b16 %v84, %v84
  %v95 = vpack.c.b16 %v85, %v85
  %v96 = vpack.c.b16 %v86, %v86
  %v97 = vpack.c.b16 %v87, %v87
  %108 = vst [vmem:[%s3] sm:$0xf] %v88
  %109 = vst [vmem:[%s3 + $0x4] sm:$0xf] %v89
  %110 = vst [vmem:[%s3 + $0x8] sm:$0xf] %v90
  %111 = vst [vmem:[%s3 + $0xc] sm:$0xf] %v91
  %112 = vst [vmem:[%s3 + $0x10] sm:$0xf] %v92
  %113 = vst [vmem:[%s3 + $0x14] sm:$0xf] %v93
  %114 = vst [vmem:[%s3 + $0x18] sm:$0xf] %v94
  %115 = vst [vmem:[%s3 + $0x1c] sm:$0xf] %v95
  %116 = vst [vmem:[%s3 + $0x20] sm:$0xf] %v96
  %117 = vst [vmem:[%s3 + $0x24] sm:$0xf] %v97
  // Predicated region
  $region14: #{_lambda_.8} parent=0 // pred_check
    _
  $region15: #{_lambda_.8} parent=0 // pred_check_branch
    %119 = sbr.rel (0) target = $region17
  $region16: #{_lambda_.8} parent=0 // pred_region
    _
  $region17: #{_lambda_.8} parent=0 // pred_fallthru
    _
  // Predicated region
  $region18: #{_lambda_.8} parent=0 // pred_check
    _
  $region19: #{_lambda_.8} parent=0 // pred_check_branch
    %121 = sbr.rel (0) target = $region21
  $region20: #{_lambda_.8} parent=0 // pred_region
    _
  $region21: #{_lambda_.8} parent=0 // pred_fallthru
    _

// kernel: _lambda_.7
$region0: #{_lambda_.7}
  #allocation0 [shape = 'u32[]', space=smem, size = 0x4, offset = 0x4, fixed_abs, tag = 'smem constant byte address 0x4 - core index']
  #allocation1 [shape = 'u32[144,128]{1,0:T(1,128)}', space=vmem, size = 0x12000, scoped, tag = 'internal scratch']
  %s0 = inlined_call_operand.vmem [shape: bf16[80,256], index: 0, kind: input, shape index: {}]
  %s1 = inlined_call_operand.vmem [shape: bf16[256,128], index: 1, kind: input, shape index: {}]
  %s2 = inlined_call_operand.vmem [shape: f32[80,128], index: 2, kind: output, shape index: {0}]
  %s3 = inlined_call_operand.vmem [shape: f32[1,1,128], index: 3, kind: output, shape index: {1}]
  %s4 = inlined_call_operand.vmem [shape: f32[1,1,128], index: 4, kind: output, shape index: {2}]
  %5 = xla_tuple %s2, %s3, %s4
  %s6 = sld [smem:[#allocation0]]
  $region34: #{_lambda_.7} parent=0
    _
  %s8 = ssub.s32 1, %s6
  %s9 = scalar_select 0, %s8, %s6
  // Predicated region
  $region2: #{_lambda_.7} parent=0 // pred_check
    _
  $region3: #{_lambda_.7} parent=0 // pred_check_branch
    %11 = sbr.rel (0) target = $region5
  $region4: #{_lambda_.7} parent=0 // pred_region
    _
  $region5: #{_lambda_.7} parent=0 // pred_fallthru
    _
  // Predicated region
  $region6: #{_lambda_.7} parent=0 // pred_check
    _
  $region7: #{_lambda_.7} parent=0 // pred_check_branch
    %13 = sbr.rel (0) target = $region9
  $region8: #{_lambda_.7} parent=0 // pred_region
    _
  $region9: #{_lambda_.7} parent=0 // pred_fallthru
    _
  %v15 = vld [vmem:[%s0] sm:$0xff]
  %v16 = vld [vmem:[%s0 + $0x8] sm:$0xff]
  %v17 = vld [vmem:[%s0 + $0x10] sm:$0xff]
  %v18 = vld [vmem:[%s0 + $0x18] sm:$0xff]
  %v19 = vld [vmem:[%s0 + $0x20] sm:$0xff]
  %v20 = vld [vmem:[%s0 + $0x28] sm:$0xff]
  %v21 = vld [vmem:[%s0 + $0x30] sm:$0xff]
  %v22 = vld [vmem:[%s0 + $0x38] sm:$0xff]
  %v23 = vld [vmem:[%s0 + $0x40] sm:$0xff]
  %v24 = vld [vmem:[%s0 + $0x48] sm:$0xff]
  %v25 = vld [vmem:[%s1] sm:$0xf]
  %v26 = vld [vmem:[%s1 + $0x4] sm:$0xf]
  %v27 = vld [vmem:[%s1 + $0x8] sm:$0xf]
  %v28 = vld [vmem:[%s1 + $0xc] sm:$0xf]
  %v29 = vld [vmem:[%s1 + $0x10] sm:$0xf]
  %v30 = vld [vmem:[%s1 + $0x14] sm:$0xf]
  %v31 = vld [vmem:[%s1 + $0x18] sm:$0xf]
  %v32 = vld [vmem:[%s1 + $0x1c] sm:$0xf]
  %v33 = vld [vmem:[%s1 + $0x20] sm:$0xf]
  %v34 = vld [vmem:[%s1 + $0x24] sm:$0xf]
  %v35 = vld [vmem:[%s1 + $0x28] sm:$0xf]
  %v36 = vld [vmem:[%s1 + $0x2c] sm:$0xf]
  %v37 = vld [vmem:[%s1 + $0x30] sm:$0xf]
  %v38 = vld [vmem:[%s1 + $0x34] sm:$0xf]
  %v39 = vld [vmem:[%s1 + $0x38] sm:$0xf]
  %v40 = vld [vmem:[%s1 + $0x3c] sm:$0xf]
  %v41 = vld [vmem:[%s1 + $0x40] sm:$0xf]
  %v42 = vld [vmem:[%s1 + $0x44] sm:$0xf]
  %v43 = vld [vmem:[%s1 + $0x48] sm:$0xf]
  %v44 = vld [vmem:[%s1 + $0x4c] sm:$0xf]
  %v45 = vld [vmem:[%s1 + $0x50] sm:$0xf]
  %v46 = vld [vmem:[%s1 + $0x54] sm:$0xf]
  %v47 = vld [vmem:[%s1 + $0x58] sm:$0xf]
  %v48 = vld [vmem:[%s1 + $0x5c] sm:$0xf]
  %v49 = vld [vmem:[%s1 + $0x60] sm:$0xf]
  %v50 = vld [vmem:[%s1 + $0x64] sm:$0xf]
  %v51 = vld [vmem:[%s1 + $0x68] sm:$0xf]
  %v52 = vld [vmem:[%s1 + $0x6c] sm:$0xf]
  %v53 = vld [vmem:[%s1 + $0x70] sm:$0xf]
  %v54 = vld [vmem:[%s1 + $0x74] sm:$0xf]
  %v55 = vld [vmem:[%s1 + $0x78] sm:$0xf]
  %v56 = vld [vmem:[%s1 + $0x7c] sm:$0xf]
  %v67 = vunpack.c.l.b16 %v15
  %v68 = vunpack.c.h.b16 %v15
  %v69 = vunpack.c.l.b16 %v16
  %v70 = vunpack.c.h.b16 %v16
  %v71 = vunpack.c.l.b16 %v17
  %v72 = vunpack.c.h.b16 %v17
  %v73 = vunpack.c.l.b16 %v18
  %v74 = vunpack.c.h.b16 %v18
  %v75 = vunpack.c.l.b16 %v19
  %v76 = vunpack.c.h.b16 %v19
  %v77 = vunpack.c.l.b16 %v20
  %v78 = vunpack.c.h.b16 %v20
  %v79 = vunpack.c.l.b16 %v21
  %v80 = vunpack.c.h.b16 %v21
  %v81 = vunpack.c.l.b16 %v22
  %v82 = vunpack.c.h.b16 %v22
  %v83 = vunpack.c.l.b16 %v23
  %v84 = vunpack.c.h.b16 %v23
  %v85 = vunpack.c.l.b16 %v24
  %v86 = vunpack.c.h.b16 %v24
  %v87 = vpack.c.b16 %v69, %v67
  %v88 = vpack.c.b16 %v70, %v68
  %v89 = vpack.c.b16 %v73, %v71
  %v90 = vpack.c.b16 %v74, %v72
  %v91 = vpack.c.b16 %v77, %v75
  %v92 = vpack.c.b16 %v78, %v76
  %v93 = vpack.c.b16 %v81, %v79
  %v94 = vpack.c.b16 %v82, %v80
  %v95 = vpack.c.b16 %v85, %v83
  %v96 = vpack.c.b16 %v86, %v84
  %v139 = vunpack.c.l.b16 %v25
  %v140 = vunpack.c.l.b16 %v26
  %v141 = vunpack.c.l.b16 %v27
  %v142 = vunpack.c.l.b16 %v28
  %v143 = vunpack.c.l.b16 %v29
  %v144 = vunpack.c.l.b16 %v30
  %v145 = vunpack.c.l.b16 %v31
  %v146 = vunpack.c.l.b16 %v32
  %v147 = vunpack.c.l.b16 %v33
  %v148 = vunpack.c.l.b16 %v34
  %v149 = vunpack.c.l.b16 %v35
  %v150 = vunpack.c.l.b16 %v36
  %v151 = vunpack.c.l.b16 %v37
  %v152 = vunpack.c.l.b16 %v38
  %v153 = vunpack.c.l.b16 %v39
  %v154 = vunpack.c.l.b16 %v40
  %v155 = vunpack.c.l.b16 %v41
  %v156 = vunpack.c.l.b16 %v42
  %v157 = vunpack.c.l.b16 %v43
  %v158 = vunpack.c.l.b16 %v44
  %v159 = vunpack.c.l.b16 %v45
  %v160 = vunpack.c.l.b16 %v46
  %v161 = vunpack.c.l.b16 %v47
  %v162 = vunpack.c.l.b16 %v48
  %v163 = vunpack.c.l.b16 %v49
  %v164 = vunpack.c.l.b16 %v50
  %v165 = vunpack.c.l.b16 %v51
  %v166 = vunpack.c.l.b16 %v52
  %v167 = vunpack.c.l.b16 %v53
  %v168 = vunpack.c.l.b16 %v54
  %v169 = vunpack.c.l.b16 %v55
  %v170 = vunpack.c.l.b16 %v56
  %v171 = vpack.c.b16 %v140, %v139
  %v172 = vpack.c.b16 %v142, %v141
  %v173 = vpack.c.b16 %v144, %v143
  %v174 = vpack.c.b16 %v146, %v145
  %v175 = vpack.c.b16 %v148, %v147
  %v176 = vpack.c.b16 %v150, %v149
  %v177 = vpack.c.b16 %v152, %v151
  %v178 = vpack.c.b16 %v154, %v153
  %v179 = vpack.c.b16 %v156, %v155
  %v180 = vpack.c.b16 %v158, %v157
  %v181 = vpack.c.b16 %v160, %v159
  %v182 = vpack.c.b16 %v162, %v161
  %v183 = vpack.c.b16 %v164, %v163
  %v184 = vpack.c.b16 %v166, %v165
  %v185 = vpack.c.b16 %v168, %v167
  %v186 = vpack.c.b16 %v170, %v169
  %203 = vmatprep.subr.bf16.mxu0 0
  %204 = vmatpush1.bf16.msra.mxu0 %v171
  %205 = vmatprep.subr.bf16.mxu0 0
  %206 = vmatpush1.bf16.msra.mxu0 %v172
  %207 = vmatprep.subr.bf16.mxu0 0
  %208 = vmatpush1.bf16.msra.mxu0 %v173
  %209 = vmatprep.subr.bf16.mxu0 0
  %210 = vmatpush1.bf16.msra.mxu0 %v174
  %211 = vmatprep.subr.bf16.mxu0 0
  %212 = vmatpush1.bf16.msra.mxu0 %v175
  %213 = vmatprep.subr.bf16.mxu0 0
  %214 = vmatpush1.bf16.msra.mxu0 %v176
  %215 = vmatprep.subr.bf16.mxu0 0
  %216 = vmatpush1.bf16.msra.mxu0 %v177
  %217 = vmatprep.subr.bf16.mxu0 0
  %218 = vmatpush1.bf16.msra.mxu0 %v178
  %219 = vmatprep.subr.bf16.mxu0 0
  %220 = vmatpush1.bf16.msra.mxu0 %v179
  %221 = vmatprep.subr.bf16.mxu0 0
  %222 = vmatpush1.bf16.msra.mxu0 %v180
  %223 = vmatprep.subr.bf16.mxu0 0
  %224 = vmatpush1.bf16.msra.mxu0 %v181
  %225 = vmatprep.subr.bf16.mxu0 0
  %226 = vmatpush1.bf16.msra.mxu0 %v182
  %227 = vmatprep.subr.bf16.mxu0 0
  %228 = vmatpush1.bf16.msra.mxu0 %v183
  %229 = vmatprep.subr.bf16.mxu0 0
  %230 = vmatpush1.bf16.msra.mxu0 %v184
  %231 = vmatprep.subr.bf16.mxu0 0
  %232 = vmatpush1.bf16.msra.mxu0 %v185
  %233 = vmatprep.subr.bf16.mxu0 0
  %234 = vmatpush1.bf16.msra.mxu0 %v186
  %235 = vmatprep.mubr.bf16.mxu0 %v88
  %236 = vmatmul.mubr.bf16.gmra.mrb[0].mxu0 %v87
  %v237 = vpop.f32.mrb[0].mxu0
  %v238 = vadd.f32 0.0, %v237
  %v239 = vpop.f32.mrb[0].mxu0
  %v240 = vpop.f32.mrb[0].mxu0
  %v241 = vadd.f32 0.0, %v240
  %v242 = vpop.f32.mrb[0].mxu0
  %243 = vmatprep.mubr.bf16.mxu0 %v90
  %244 = vmatmul.mubr.bf16.gmra.mrb[0].mxu0 %v89
  %v245 = vpop.f32.mrb[0].mxu0
  %v246 = vadd.f32 0.0, %v245
  %v247 = vpop.f32.mrb[0].mxu0
  %v248 = vpop.f32.mrb[0].mxu0
  %v249 = vadd.f32 0.0, %v248
  %v250 = vpop.f32.mrb[0].mxu0
  %251 = vmatprep.mubr.bf16.mxu0 %v92
  %252 = vmatmul.mubr.bf16.gmra.mrb[0].mxu0 %v91
  %v253 = vpop.f32.mrb[0].mxu0
  %v254 = vadd.f32 0.0, %v253
  %v255 = vpop.f32.mrb[0].mxu0
  %v256 = vpop.f32.mrb[0].mxu0
  %v257 = vadd.f32 0.0, %v256
  %v258 = vpop.f32.mrb[0].mxu0
  %259 = vmatprep.mubr.bf16.mxu0 %v94
  %260 = vmatmul.mubr.bf16.gmra.mrb[0].mxu0 %v93
  %v261 = vpop.f32.mrb[0].mxu0
  %v262 = vadd.f32 0.0, %v261
  %v263 = vpop.f32.mrb[0].mxu0
  %v264 = vpop.f32.mrb[0].mxu0
  %v265 = vadd.f32 0.0, %v264
  %v266 = vpop.f32.mrb[0].mxu0
  %267 = vmatprep.mubr.bf16.mxu0 %v96
  %268 = vmatmul.mubr.bf16.gmra.mrb[0].mxu0 %v95
  %v269 = vpop.f32.mrb[0].mxu0
  %v270 = vadd.f32 0.0, %v269
  %v271 = vpop.f32.mrb[0].mxu0
  %v272 = vpop.f32.mrb[0].mxu0
  %v273 = vadd.f32 0.0, %v272
  %v274 = vpop.f32.mrb[0].mxu0
  %275 = vdwg.mxu0
  %276 = vst [vmem:[%s2] sm:$0xff] %v238
  %277 = vst [vmem:[%s2 + $0x8] sm:$0xff] %v241
  %278 = vst [vmem:[%s2 + $0x10] sm:$0xff] %v246
  %279 = vst [vmem:[%s2 + $0x18] sm:$0xff] %v249
  %280 = vst [vmem:[%s2 + $0x20] sm:$0xff] %v254
  %281 = vst [vmem:[%s2 + $0x28] sm:$0xff] %v257
  %282 = vst [vmem:[%s2 + $0x30] sm:$0xff] %v262
  %283 = vst [vmem:[%s2 + $0x38] sm:$0xff] %v265
  %284 = vst [vmem:[%s2 + $0x40] sm:$0xff] %v270
  %285 = vst [vmem:[%s2 + $0x48] sm:$0xff] %v273
  %v286 = vadd.f32 %v238, %v241
  %v287 = vadd.f32 %v286, %v246
  %v288 = vadd.f32 %v287, %v249
  %v289 = vadd.f32 %v288, %v254
  %v290 = vadd.f32 %v289, %v257
  %v291 = vadd.f32 %v290, %v262
  %v292 = vadd.f32 %v291, %v265
  %v293 = vadd.f32 %v292, %v270
  %v294 = vadd.f32 %v293, %v273
  %v295 = vrot.slane %v294, 4
  %v296 = vadd.f32 %v294, %v295
  %v297 = vrot.slane %v296, 2
  %v298 = vadd.f32 %v296, %v297
  %v299 = vrot.slane %v298, 1
  %v300 = vadd.f32 %v298, %v299
  %301 = vst [vmem:[%s3] sm:$0x1] %v300
  %v302 = vmul.f32 %v238, %v238
  %v303 = vmul.f32 %v241, %v241
  %v304 = vmul.f32 %v246, %v246
  %v305 = vmul.f32 %v249, %v249
  %v306 = vmul.f32 %v254, %v254
  %v307 = vmul.f32 %v257, %v257
  %v308 = vmul.f32 %v262, %v262
  %v309 = vmul.f32 %v265, %v265
  %v310 = vmul.f32 %v270, %v270
  %v311 = vmul.f32 %v273, %v273
  %v312 = vadd.f32 %v302, %v303
  %v313 = vadd.f32 %v312, %v304
  %v314 = vadd.f32 %v313, %v305
  %v315 = vadd.f32 %v314, %v306
  %v316 = vadd.f32 %v315, %v307
  %v317 = vadd.f32 %v316, %v308
  %v318 = vadd.f32 %v317, %v309
  %v319 = vadd.f32 %v318, %v310
  %v320 = vadd.f32 %v319, %v311
  %v321 = vrot.slane %v320, 4
  %v322 = vadd.f32 %v320, %v321
  %v323 = vrot.slane %v322, 2
  %v324 = vadd.f32 %v322, %v323
  %v325 = vrot.slane %v324, 1
  %v326 = vadd.f32 %v324, %v325
  %327 = vst [vmem:[%s4] sm:$0x1] %v326
  // Predicated region
  $region10: #{_lambda_.7} parent=0 // pred_check
    _
  $region11: #{_lambda_.7} parent=0 // pred_check_branch
    %329 = sbr.rel (0) target = $region13
  $region12: #{_lambda_.7} parent=0 // pred_region
    _
  $region13: #{_lambda_.7} parent=0 // pred_fallthru
    _
  // Predicated region
  $region14: #{_lambda_.7} parent=0 // pred_check
    _
  $region15: #{_lambda_.7} parent=0 // pred_check_branch
    %331 = sbr.rel (0) target = $region17
  $region16: #{_lambda_.7} parent=0 // pred_region
    _
  $region17: #{_lambda_.7} parent=0 // pred_fallthru
    _
  // Predicated region
  $region18: #{_lambda_.7} parent=0 // pred_check
    _
  $region19: #{_lambda_.7} parent=0 // pred_check_branch
    %333 = sbr.rel (0) target = $region21
  $region20: #{_lambda_.7} parent=0 // pred_region
    _
  $region21: #{_lambda_.7} parent=0 // pred_fallthru
    _
  // Predicated region
  $region22: #{_lambda_.7} parent=0 // pred_check
    _
  $region23: #{_lambda_.7} parent=0 // pred_check_branch
    %335 = sbr.rel (0) target = $region25
  $region24: #{_lambda_.7} parent=0 // pred_region
    _
  $region25: #{_lambda_.7} parent=0 // pred_fallthru
    _
  // Predicated region
  $region26: #{_lambda_.7} parent=0 // pred_check
    _
  $region27: #{_lambda_.7} parent=0 // pred_check_branch
    %337 = sbr.rel (0) target = $region29
  $region28: #{_lambda_.7} parent=0 // pred_region
    _
  $region29: #{_lambda_.7} parent=0 // pred_fallthru
    _
  // Predicated region
  $region30: #{_lambda_.7} parent=0 // pred_check
    _
  $region31: #{_lambda_.7} parent=0 // pred_check_branch
    %339 = sbr.rel (0) target = $region33
  $region32: #{_lambda_.7} parent=0 // pred_region
    _
  $region33: #{_lambda_.7} parent=0 // pred_fallthru
    _

// kernel: _lambda_.9
$region0: #{_lambda_.9}
  #allocation0 [shape = 'u32[]', space=smem, size = 0x4, offset = 0x4, fixed_abs, tag = 'smem constant byte address 0x4 - core index']
  #allocation1 [shape = 'u32[144,128]{1,0:T(1,128)}', space=vmem, size = 0x12000, scoped, tag = 'internal scratch']
  #allocation2 [shape = 'f32[8,128]{1,0:T(8,128)}', space=vmem, size = 0x1000, scoped, tag = 'scratch operand']
  %s0 = inlined_call_operand.vmem [shape: bf16[8,80], index: 0, kind: input, shape index: {}]
  %s1 = inlined_call_operand.vmem [shape: bf16[80,128], index: 1, kind: input, shape index: {}]
  %s2 = inlined_call_operand.vmem [shape: f32[128,128], index: 2, kind: input, shape index: {}]
  %s3 = inlined_call_operand.vmem [shape: f32[1,128], index: 3, kind: input, shape index: {}]
  %s4 = inlined_call_operand.vmem [shape: f32[8,128], index: 4, kind: output, shape index: {}]
  %s5 = sld [smem:[#allocation0]]
  $region34: #{_lambda_.9} parent=0
    _
  %s7 = ssub.s32 1, %s5
  %s8 = scalar_select 0, %s7, %s5
  // Predicated region
  $region2: #{_lambda_.9} parent=0 // pred_check
    _
  $region3: #{_lambda_.9} parent=0 // pred_check_branch
    %10 = sbr.rel (0) target = $region5
  $region4: #{_lambda_.9} parent=0 // pred_region
    _
  $region5: #{_lambda_.9} parent=0 // pred_fallthru
    _
  // Predicated region
  $region6: #{_lambda_.9} parent=0 // pred_check
    _
  $region7: #{_lambda_.9} parent=0 // pred_check_branch
    %12 = sbr.rel (0) target = $region9
  $region8: #{_lambda_.9} parent=0 // pred_region
    _
  $region9: #{_lambda_.9} parent=0 // pred_fallthru
    _
  // Predicated region
  $region10: #{_lambda_.9} parent=0 // pred_check
    _
  $region11: #{_lambda_.9} parent=0 // pred_check_branch
    %14 = sbr.rel (0) target = $region13
  $region12: #{_lambda_.9} parent=0 // pred_region
    _
  $region13: #{_lambda_.9} parent=0 // pred_fallthru
    _
  // Predicated region
  $region14: #{_lambda_.9} parent=0 // pred_check
    _
  $region15: #{_lambda_.9} parent=0 // pred_check_branch
    %16 = sbr.rel (0) target = $region17
  $region16: #{_lambda_.9} parent=0 // pred_region
    _
  $region17: #{_lambda_.9} parent=0 // pred_fallthru
    _
  %p18 = scmp.eq.s32.totalorder 0, 0
  // Predicated region
  $region18: #{_lambda_.9} parent=0 // pred_check
    %p19 = pneg %p18
  $region19: #{_lambda_.9} parent=0 // pred_check_branch
    %21 = sbr.rel (%p19) target = $region21
  $region20: #{_lambda_.9} parent=0 // pred_region
    %22 = vst [vmem:[#allocation2] sm:$0xff] 0.0
  $region21: #{_lambda_.9} parent=0 // pred_fallthru
    _
  %v23 = vld [vmem:[#allocation2] sm:$0xff]
  %v24 = vld [vmem:[%s0] sm:$0xf]
  %v25 = vld [vmem:[%s1] sm:$0xf]
  %v26 = vld [vmem:[%s1 + $0x4] sm:$0xf]
  %v27 = vld [vmem:[%s1 + $0x8] sm:$0xf]
  %v28 = vld [vmem:[%s1 + $0xc] sm:$0xf]
  %v29 = vld [vmem:[%s1 + $0x10] sm:$0xf]
  %v30 = vld [vmem:[%s1 + $0x14] sm:$0xf]
  %v31 = vld [vmem:[%s1 + $0x18] sm:$0xf]
  %v32 = vld [vmem:[%s1 + $0x1c] sm:$0xf]
  %v33 = vld [vmem:[%s1 + $0x20] sm:$0xf]
  %v34 = vld [vmem:[%s1 + $0x24] sm:$0xf]
  %v45 = vunpack.c.l.b16 %v25
  %v46 = vunpack.c.l.b16 %v26
  %v47 = vunpack.c.l.b16 %v27
  %v48 = vunpack.c.l.b16 %v28
  %v49 = vunpack.c.l.b16 %v29
  %v50 = vunpack.c.l.b16 %v30
  %v51 = vunpack.c.l.b16 %v31
  %v52 = vunpack.c.l.b16 %v32
  %v53 = vunpack.c.l.b16 %v33
  %v54 = vunpack.c.l.b16 %v34
  %v55 = vpack.c.b16 %v46, %v45
  %v56 = vpack.c.b16 %v48, %v47
  %v57 = vpack.c.b16 %v50, %v49
  %v58 = vpack.c.b16 %v52, %v51
  %v59 = vpack.c.b16 %v54, %v53
  %vm65 = vcmask 654336
  %v67 = vsel %vm65, %v24, 0
  %69 = vmatprep.subr.bf16.mxu0 0
  %70 = vmatpush1.bf16.msra.mxu0 %v55
  %71 = vmatprep.subr.bf16.mxu0 0
  %72 = vmatpush1.bf16.msra.mxu0 %v56
  %73 = vmatprep.subr.bf16.mxu0 0
  %74 = vmatpush1.bf16.msra.mxu0 %v57
  %75 = vmatprep.subr.bf16.mxu0 0
  %76 = vmatpush1.bf16.msra.mxu0 %v58
  %77 = vmatprep.subr.bf16.mxu0 0
  %78 = vmatpush1.bf16.msra.mxu0 %v59
  %79 = vmatprep.subr.bf16.mxu0 0
  %80 = vmatpush1.bf16.msra.mxu0 0
  %81 = vmatprep.subr.bf16.mxu0 0
  %82 = vmatpush1.bf16.msra.mxu0 0
  %83 = vmatprep.subr.bf16.mxu0 0
  %84 = vmatpush1.bf16.msra.mxu0 0
  %85 = vmatprep.subr.bf16.mxu0 0
  %86 = vmatpush1.bf16.msra.mxu0 0
  %87 = vmatprep.subr.bf16.mxu0 0
  %88 = vmatpush1.bf16.msra.mxu0 0
  %89 = vmatprep.subr.bf16.mxu0 0
  %90 = vmatpush1.bf16.msra.mxu0 0
  %91 = vmatprep.subr.bf16.mxu0 0
  %92 = vmatpush1.bf16.msra.mxu0 0
  %93 = vmatprep.subr.bf16.mxu0 0
  %94 = vmatpush1.bf16.msra.mxu0 0
  %95 = vmatprep.subr.bf16.mxu0 0
  %96 = vmatpush1.bf16.msra.mxu0 0
  %97 = vmatprep.subr.bf16.mxu0 0
  %98 = vmatpush1.bf16.msra.mxu0 0
  %99 = vmatprep.subr.bf16.mxu0 0
  %100 = vmatpush1.bf16.msra.mxu0 0
  %101 = vmatprep.mubr.bf16.mxu0 0
  %102 = vmatmul.mubr.bf16.gmra.mrb[0].mxu0 %v67
  %v103 = vpop.f32.mrb[0].mxu0
  %v104 = vadd.f32 0.0, %v103
  %v105 = vpop.f32.mrb[0].mxu0
  %v106 = vpop.f32.mrb[0].mxu0
  %v107 = vpop.f32.mrb[0].mxu0
  %108 = vdwg.mxu0
  %v109 = vadd.f32 %v23, %v104
  %110 = vst [vmem:[#allocation2] sm:$0xff] %v109
  // Predicated region
  $region22: #{_lambda_.9} parent=0 // pred_check
    %p111 = pneg %p18
  $region23: #{_lambda_.9} parent=0 // pred_check_branch
    %113 = sbr.rel (%p111) target = $region25
  $region24: #{_lambda_.9} parent=0 // pred_region
    %v114 = vld [vmem:[#allocation2] sm:$0xff]
    %v115 = vld [vmem:[%s2] sm:$0xff]
    %v116 = vld [vmem:[%s2 + $0x8] sm:$0xff]
    %v117 = vld [vmem:[%s2 + $0x10] sm:$0xff]
    %v118 = vld [vmem:[%s2 + $0x18] sm:$0xff]
    %v119 = vld [vmem:[%s2 + $0x20] sm:$0xff]
    %v120 = vld [vmem:[%s2 + $0x28] sm:$0xff]
    %v121 = vld [vmem:[%s2 + $0x30] sm:$0xff]
    %v122 = vld [vmem:[%s2 + $0x38] sm:$0xff]
    %v123 = vld [vmem:[%s2 + $0x40] sm:$0xff]
    %v124 = vld [vmem:[%s2 + $0x48] sm:$0xff]
    %v125 = vld [vmem:[%s2 + $0x50] sm:$0xff]
    %v126 = vld [vmem:[%s2 + $0x58] sm:$0xff]
    %v127 = vld [vmem:[%s2 + $0x60] sm:$0xff]
    %v128 = vld [vmem:[%s2 + $0x68] sm:$0xff]
    %v129 = vld [vmem:[%s2 + $0x70] sm:$0xff]
    %v130 = vld [vmem:[%s2 + $0x78] sm:$0xff]
    %v131 = vld [vmem:[%s3] sm:$0x1]
    %v133 = vlaneseq
    %v134 = vshrl.u32 %v133, 7
    %v135 = vsub.s32 0, %v134
    %v136 = vrot.slane %v131, %v135
    %138 = vmatprep.subr.mxu0 0.0
    %139 = vmatpush1.msra.mxu0 %v115
    %140 = vmatprep.subr.mxu0 0.0
    %141 = vmatpush1.msra.mxu0 %v116
    %142 = vmatprep.subr.mxu0 0.0
    %143 = vmatpush1.msra.mxu0 %v117
    %144 = vmatprep.subr.mxu0 0.0
    %145 = vmatpush1.msra.mxu0 %v118
    %146 = vmatprep.subr.mxu0 0.0
    %147 = vmatpush1.msra.mxu0 %v119
    %148 = vmatprep.subr.mxu0 0.0
    %149 = vmatpush1.msra.mxu0 %v120
    %150 = vmatprep.subr.mxu0 0.0
    %151 = vmatpush1.msra.mxu0 %v121
    %152 = vmatprep.subr.mxu0 0.0
    %153 = vmatpush1.msra.mxu0 %v122
    %154 = vmatprep.subr.mxu0 0.0
    %155 = vmatpush1.msra.mxu0 %v123
    %156 = vmatprep.subr.mxu0 0.0
    %157 = vmatpush1.msra.mxu0 %v124
    %158 = vmatprep.subr.mxu0 0.0
    %159 = vmatpush1.msra.mxu0 %v125
    %160 = vmatprep.subr.mxu0 0.0
    %161 = vmatpush1.msra.mxu0 %v126
    %162 = vmatprep.subr.mxu0 0.0
    %163 = vmatpush1.msra.mxu0 %v127
    %164 = vmatprep.subr.mxu0 0.0
    %165 = vmatpush1.msra.mxu0 %v128
    %166 = vmatprep.subr.mxu0 0.0
    %167 = vmatpush1.msra.mxu0 %v129
    %168 = vmatprep.subr.mxu0 0.0
    %169 = vmatpush1.msra.mxu0 %v130
    %170 = vmatprep.subr.mxu0 0.0
    %171 = vmatpush1.msra.mxu0 0.0
    %172 = vmatprep.subr.mxu0 0.0
    %173 = vmatpush1.msra.mxu0 0.0
    %174 = vmatprep.subr.mxu0 0.0
    %175 = vmatpush1.msra.mxu0 0.0
    %176 = vmatprep.subr.mxu0 0.0
    %177 = vmatpush1.msra.mxu0 0.0
    %178 = vmatprep.subr.mxu0 0.0
    %179 = vmatpush1.msra.mxu0 0.0
    %180 = vmatprep.subr.mxu0 0.0
    %181 = vmatpush1.msra.mxu0 0.0
    %182 = vmatprep.subr.mxu0 0.0
    %183 = vmatpush1.msra.mxu0 0.0
    %184 = vmatprep.subr.mxu0 0.0
    %185 = vmatpush1.msra.mxu0 0.0
    %186 = vmatprep.subr.mxu0 0.0
    %187 = vmatpush1.msra.mxu0 0.0
    %188 = vmatprep.subr.mxu0 0.0
    %189 = vmatpush1.msra.mxu0 0.0
    %190 = vmatprep.subr.mxu0 0.0
    %191 = vmatpush1.msra.mxu0 0.0
    %192 = vmatprep.subr.mxu0 0.0
    %193 = vmatpush1.msra.mxu0 0.0
    %194 = vmatprep.subr.mxu0 0.0
    %195 = vmatpush1.msra.mxu0 0.0
    %196 = vmatprep.subr.mxu0 0.0
    %197 = vmatpush1.msra.mxu0 0.0
    %198 = vmatprep.subr.mxu0 0.0
    %199 = vmatpush1.msra.mxu0 0.0
    %200 = vmatprep.subr.mxu0 0.0
    %201 = vmatpush1.msra.mxu0 0.0
    %202 = vmatprep.mubr.f32.mxu0 0.0
    %203 = vmatmul.mubr.f32.gmra.mrb[0].mxu0 %v114
    %v204 = vpop.f32.mrb[0].mxu0
    %v205 = vadd.f32 %v136, %v204
    %v206 = vpop.f32.mrb[0].mxu0
    %207 = vdwg.mxu0
    %208 = vst [vmem:[%s4] sm:$0xff] %v205
  $region25: #{_lambda_.9} parent=0 // pred_fallthru
    _
  // Predicated region
  $region26: #{_lambda_.9} parent=0 // pred_check
    _
  $region27: #{_lambda_.9} parent=0 // pred_check_branch
    %210 = sbr.rel (0) target = $region29
  $region28: #{_lambda_.9} parent=0 // pred_region
    _
  $region29: #{_lambda_.9} parent=0 // pred_fallthru
    _
  // Predicated region
  $region30: #{_lambda_.9} parent=0 // pred_check
    _
  $region31: #{_lambda_.9} parent=0 // pred_check_branch
    %212 = sbr.rel (0) target = $region33
  $region32: #{_lambda_.9} parent=0 // pred_region
    _
  $region33: #{_lambda_.9} parent=0 // pred_fallthru
    _

</llo_original>
